<compile_context>
chip_gen: v6e
topology: v6e:2x2x1
jax: 0.10.0
libtpu: 0.0.40
codegen_flags: <defaults>
</compile_context>

<pallas_src>
import functools

import jax
import jax.numpy as jnp
from jax.experimental import pallas as pl
from jax.experimental.pallas import tpu as pltpu


# ---------------------------------------------------------------------------
# Fully fused per-batch kernel:
#   LN(x) @ Wq, LN(ctx) @ Wkv, per-head softmax(QK^T*scale)V, concat heads,
#   output projection with bias.
# ---------------------------------------------------------------------------
def _mhca_kernel(x_ref, ctx_ref, gq_ref, bq_ref, gkv_ref, bkv_ref,
                 wq_ref, wkv_ref, wo_ref, bo_ref, o_ref,
                 *, heads, dim_head, scale):
    f32 = jnp.float32
    bf16 = jnp.bfloat16
    inner = heads * dim_head

    # ---- LayerNorm (f32 statistics, eps=1e-5, biased variance) -------------
    def layer_norm(t, g, b):
        mu = jnp.mean(t, axis=-1, keepdims=True)
        var = jnp.mean((t - mu) ** 2, axis=-1, keepdims=True)
        return (t - mu) * jax.lax.rsqrt(var + 1e-5) * g + b

    xn = layer_norm(x_ref[0].astype(f32),
                    gq_ref[0].astype(f32), bq_ref[0].astype(f32))      # (Nq, D)
    cn = layer_norm(ctx_ref[0].astype(f32),
                    gkv_ref[0].astype(f32), bkv_ref[0].astype(f32))    # (Nk, D)

    # ---- Projections on the MXU: bf16 inputs, f32 accumulation -------------
    q = jnp.dot(xn.astype(bf16), wq_ref[...].astype(bf16),
                preferred_element_type=f32)                            # (Nq, inner)
    kv = jnp.dot(cn.astype(bf16), wkv_ref[...].astype(bf16),
                 preferred_element_type=f32)                           # (Nk, 2*inner)
    k = kv[:, :inner]
    v = kv[:, inner:]

    # ---- Per-head attention (static unroll, all ops stay 2-D) --------------
    head_outs = []
    for h in range(heads):
        sl = slice(h * dim_head, (h + 1) * dim_head)
        qh = q[:, sl].astype(bf16)                                     # (Nq, Dh)
        kh = k[:, sl].astype(bf16)                                     # (Nk, Dh)
        vh = v[:, sl].astype(bf16)                                     # (Nk, Dh)
        # qh @ kh^T without an explicit transpose: contract last dims.
        dots = jax.lax.dot_general(
            qh, kh, (((1,), (1,)), ((), ())),
            preferred_element_type=f32) * scale                        # (Nq, Nk)
        m = jnp.max(dots, axis=-1, keepdims=True)
        e = jnp.exp(dots - m)
        p = e * pl.reciprocal(jnp.sum(e, axis=-1, keepdims=True), approx=True)
        head_outs.append(
            jnp.dot(p.astype(bf16), vh, preferred_element_type=f32))   # (Nq, Dh)

    attn_out = jnp.concatenate(head_outs, axis=-1)                     # (Nq, inner) lane-dense

    # ---- Output projection with bias ---------------------------------------
    out = jnp.dot(attn_out.astype(bf16), wo_ref[...].astype(bf16),
                  preferred_element_type=f32) + bo_ref[0].astype(f32)
    o_ref[0] = out.astype(o_ref.dtype)


def mhca_forward(x, context, params, *, heads, dim_head):
    B, Nq, D = x.shape
    Nk = context.shape[1]
    inner = heads * dim_head
    scale = dim_head ** (-0.5)

    kern = functools.partial(_mhca_kernel, heads=heads, dim_head=dim_head,
                             scale=scale)
    return pl.pallas_call(
        kern,
        out_shape=jax.ShapeDtypeStruct((B, Nq, D), x.dtype),
        grid=(B,),
        in_specs=[
            pl.BlockSpec((1, Nq, D), lambda i: (i, 0, 0)),        # x
            pl.BlockSpec((1, Nk, D), lambda i: (i, 0, 0)),        # context
            pl.BlockSpec((1, D), lambda i: (0, 0)),               # gamma_q
            pl.BlockSpec((1, D), lambda i: (0, 0)),               # beta_q
            pl.BlockSpec((1, D), lambda i: (0, 0)),               # gamma_kv
            pl.BlockSpec((1, D), lambda i: (0, 0)),               # beta_kv
            pl.BlockSpec((D, inner), lambda i: (0, 0)),           # w_q
            pl.BlockSpec((D, 2 * inner), lambda i: (0, 0)),       # w_kv
            pl.BlockSpec((inner, D), lambda i: (0, 0)),           # w_o
            pl.BlockSpec((1, D), lambda i: (0, 0)),               # b_o
        ],
        out_specs=pl.BlockSpec((1, Nq, D), lambda i: (i, 0, 0)),
        compiler_params=pltpu.CompilerParams(
            dimension_semantics=("parallel",)),
    )(x, context,
      params["g_q"].reshape(1, D), params["b_q"].reshape(1, D),
      params["g_kv"].reshape(1, D), params["b_kv"].reshape(1, D),
      params["w_q"], params["w_kv"], params["w_o"],
      params["b_o"].reshape(1, D))


# ---------------------------------------------------------------------------
# Pure-JAX f32 reference (mirrors the PyTorch module) for a correctness check.
# ---------------------------------------------------------------------------
def mhca_reference(x, context, params, *, heads, dim_head):
    def ln(t, g, b):
        mu = t.mean(-1, keepdims=True)
        var = ((t - mu) ** 2).mean(-1, keepdims=True)
        return (t - mu) / jnp.sqrt(var + 1e-5) * g + b

    inner = heads * dim_head
    scale = dim_head ** (-0.5)
    q = ln(x, params["g_q"], params["b_q"]) @ params["w_q"]
    kv = ln(context, params["g_kv"], params["b_kv"]) @ params["w_kv"]
    k, v = kv[..., :inner], kv[..., inner:]

    def split(t):
        B, N, _ = t.shape
        return t.reshape(B, N, heads, dim_head).transpose(0, 2, 1, 3)

    qh, kh, vh = split(q), split(k), split(v)
    dots = jnp.einsum("bhqd,bhkd->bhqk", qh, kh) * scale
    p = jax.nn.softmax(dots, axis=-1)
    o = jnp.einsum("bhqk,bhkd->bhqd", p, vh)
    B, H, Nq, Dh = o.shape
    o = o.transpose(0, 2, 1, 3).reshape(B, Nq, H * Dh)
    return o @ params["w_o"] + params["b_o"]


def init_params(key, embed_dim, heads, dim_head):
    inner = heads * dim_head
    k1, k2, k3, k4 = jax.random.split(key, 4)
    return {
        # LayerNorm params (PyTorch default init: weight=1, bias=0)
        "g_q": jnp.ones((embed_dim,), jnp.float32),
        "b_q": jnp.zeros((embed_dim,), jnp.float32),
        "g_kv": jnp.ones((embed_dim,), jnp.float32),
        "b_kv": jnp.zeros((embed_dim,), jnp.float32),
        # Linear weights stored as (in, out) so y = x @ W
        "w_q": jax.random.normal(k1, (embed_dim, inner), jnp.float32) * 0.05,
        "w_kv": jax.random.normal(k2, (embed_dim, 2 * inner), jnp.float32) * 0.05,
        "w_o": jax.random.normal(k3, (inner, embed_dim), jnp.float32) * 0.05,
        "b_o": jax.random.normal(k4, (embed_dim,), jnp.float32) * 0.05,
    }


if __name__ == "__main__":
    # Small shapes consistent with the module: [B, seq, embed_dim]
    B, Nq, Nkv, embed_dim = 2, 8, 16, 32
    heads, dim_head = 4, 32

    key = jax.random.PRNGKey(0)
    kx, kc, kp = jax.random.split(key, 3)
    x = jax.random.normal(kx, (B, Nq, embed_dim), jnp.float32)
    context = jax.random.normal(kc, (B, Nkv, embed_dim), jnp.float32)
    params = init_params(kp, embed_dim, heads, dim_head)

    fwd = jax.jit(functools.partial(mhca_forward, heads=heads, dim_head=dim_head))
    out = fwd(x, context, params)
    jax.block_until_ready(out)
    assert out.shape == (B, Nq, embed_dim)

    # Loose tolerance: kernel uses bf16 MXU operands + approx reciprocal.
    ref = mhca_reference(x, context, params, heads=heads, dim_head=dim_head)
    max_err = float(jnp.max(jnp.abs(out - ref)))
    assert max_err < 5e-2, f"max_err={max_err}"

    print("KERNEL_OK")
</pallas_src>

<mosaic_0001>
module attributes {stable_mosaic.version = 11 : i64} {
  func.func @_mhca_kernel(%arg0: i32, %arg1: memref<1x8x32xf32, #tpu.memory_space<vmem>>, %arg2: memref<1x16x32xf32, #tpu.memory_space<vmem>>, %arg3: memref<1x32xf32, #tpu.memory_space<vmem>>, %arg4: memref<1x32xf32, #tpu.memory_space<vmem>>, %arg5: memref<1x32xf32, #tpu.memory_space<vmem>>, %arg6: memref<1x32xf32, #tpu.memory_space<vmem>>, %arg7: memref<32x128xf32, #tpu.memory_space<vmem>>, %arg8: memref<32x256xf32, #tpu.memory_space<vmem>>, %arg9: memref<128x32xf32, #tpu.memory_space<vmem>>, %arg10: memref<1x32xf32, #tpu.memory_space<vmem>>, %arg11: memref<1x8x32xf32, #tpu.memory_space<vmem>>) attributes {dimension_semantics = [#tpu.dimension_semantics<parallel>], iteration_bounds = array<i64: 2>, scalar_prefetch = 0 : i64, scratch_operands = 0 : i64, tpu.core_type = #tpu.core_type<tc>, window_params = [{transform_indices = @transform_0, window_bounds = array<i64: 1, 8, 32>}, {transform_indices = @transform_1, window_bounds = array<i64: 1, 16, 32>}, {pipeline_mode = #tpu.pipeline_mode<synchronous>, transform_indices = @transform_2, window_bounds = array<i64: 1, 32>}, {pipeline_mode = #tpu.pipeline_mode<synchronous>, transform_indices = @transform_3, window_bounds = array<i64: 1, 32>}, {pipeline_mode = #tpu.pipeline_mode<synchronous>, transform_indices = @transform_4, window_bounds = array<i64: 1, 32>}, {pipeline_mode = #tpu.pipeline_mode<synchronous>, transform_indices = @transform_5, window_bounds = array<i64: 1, 32>}, {pipeline_mode = #tpu.pipeline_mode<synchronous>, transform_indices = @transform_6, window_bounds = array<i64: 32, 128>}, {pipeline_mode = #tpu.pipeline_mode<synchronous>, transform_indices = @transform_7, window_bounds = array<i64: 32, 256>}, {pipeline_mode = #tpu.pipeline_mode<synchronous>, transform_indices = @transform_8, window_bounds = array<i64: 128, 32>}, {pipeline_mode = #tpu.pipeline_mode<synchronous>, transform_indices = @transform_9, window_bounds = array<i64: 1, 32>}, {transform_indices = @transform_10, window_bounds = array<i64: 1, 8, 32>}]} {
    %c0 = arith.constant 0 : index
    %c0_0 = arith.constant 0 : index
    %c0_1 = arith.constant 0 : index
    %0 = vector.load %arg1[%c0, %c0_0, %c0_1] : memref<1x8x32xf32, #tpu.memory_space<vmem>>, vector<1x8x32xf32>
    %1 = vector.shape_cast %0 : vector<1x8x32xf32> to vector<8x32xf32>
    %c0_2 = arith.constant 0 : index
    %c0_3 = arith.constant 0 : index
    %2 = vector.load %arg3[%c0_2, %c0_3] : memref<1x32xf32, #tpu.memory_space<vmem>>, vector<1x32xf32>
    %3 = vector.shape_cast %2 : vector<1x32xf32> to vector<32xf32>
    %c0_4 = arith.constant 0 : index
    %c0_5 = arith.constant 0 : index
    %4 = vector.load %arg4[%c0_4, %c0_5] : memref<1x32xf32, #tpu.memory_space<vmem>>, vector<1x32xf32>
    %5 = vector.shape_cast %4 : vector<1x32xf32> to vector<32xf32>
    %cst = arith.constant dense<0.000000e+00> : vector<8xf32>
    %6 = vector.multi_reduction <add>, %1, %cst [1] : vector<8x32xf32> to vector<8xf32>
    %7 = vector.shape_cast %6 : vector<8xf32> to vector<8x1xf32>
    %cst_6 = arith.constant 3.200000e+01 : f32
    %8 = vector.broadcast %cst_6 : f32 to vector<8x1xf32>
    %9 = arith.divf %7, %8 : vector<8x1xf32>
    %10 = vector.broadcast %9 : vector<8x1xf32> to vector<8x32xf32>
    %11 = arith.subf %1, %10 : vector<8x32xf32>
    %12 = arith.mulf %11, %11 : vector<8x32xf32>
    %cst_7 = arith.constant dense<0.000000e+00> : vector<8xf32>
    %13 = vector.multi_reduction <add>, %12, %cst_7 [1] : vector<8x32xf32> to vector<8xf32>
    %14 = vector.shape_cast %13 : vector<8xf32> to vector<8x1xf32>
    %cst_8 = arith.constant 3.200000e+01 : f32
    %15 = vector.broadcast %cst_8 : f32 to vector<8x1xf32>
    %16 = arith.divf %14, %15 : vector<8x1xf32>
    %17 = vector.broadcast %9 : vector<8x1xf32> to vector<8x32xf32>
    %18 = arith.subf %1, %17 : vector<8x32xf32>
    %cst_9 = arith.constant 9.99999974E-6 : f32
    %19 = vector.broadcast %cst_9 : f32 to vector<8x1xf32>
    %20 = arith.addf %16, %19 : vector<8x1xf32>
    %21 = math.rsqrt %20 : vector<8x1xf32>
    %22 = vector.broadcast %21 : vector<8x1xf32> to vector<8x32xf32>
    %23 = arith.mulf %18, %22 : vector<8x32xf32>
    %24 = vector.shape_cast %3 : vector<32xf32> to vector<1x32xf32>
    %25 = vector.broadcast %24 : vector<1x32xf32> to vector<8x32xf32>
    %26 = arith.mulf %23, %25 : vector<8x32xf32>
    %27 = vector.shape_cast %5 : vector<32xf32> to vector<1x32xf32>
    %28 = vector.broadcast %27 : vector<1x32xf32> to vector<8x32xf32>
    %29 = arith.addf %26, %28 : vector<8x32xf32>
    %c0_10 = arith.constant 0 : index
    %c0_11 = arith.constant 0 : index
    %c0_12 = arith.constant 0 : index
    %30 = vector.load %arg2[%c0_10, %c0_11, %c0_12] : memref<1x16x32xf32, #tpu.memory_space<vmem>>, vector<1x16x32xf32>
    %31 = vector.shape_cast %30 : vector<1x16x32xf32> to vector<16x32xf32>
    %c0_13 = arith.constant 0 : index
    %c0_14 = arith.constant 0 : index
    %32 = vector.load %arg5[%c0_13, %c0_14] : memref<1x32xf32, #tpu.memory_space<vmem>>, vector<1x32xf32>
    %33 = vector.shape_cast %32 : vector<1x32xf32> to vector<32xf32>
    %c0_15 = arith.constant 0 : index
    %c0_16 = arith.constant 0 : index
    %34 = vector.load %arg6[%c0_15, %c0_16] : memref<1x32xf32, #tpu.memory_space<vmem>>, vector<1x32xf32>
    %35 = vector.shape_cast %34 : vector<1x32xf32> to vector<32xf32>
    %cst_17 = arith.constant dense<0.000000e+00> : vector<16xf32>
    %36 = vector.multi_reduction <add>, %31, %cst_17 [1] : vector<16x32xf32> to vector<16xf32>
    %37 = vector.shape_cast %36 : vector<16xf32> to vector<16x1xf32>
    %cst_18 = arith.constant 3.200000e+01 : f32
    %38 = vector.broadcast %cst_18 : f32 to vector<16x1xf32>
    %39 = arith.divf %37, %38 : vector<16x1xf32>
    %40 = vector.broadcast %39 : vector<16x1xf32> to vector<16x32xf32>
    %41 = arith.subf %31, %40 : vector<16x32xf32>
    %42 = arith.mulf %41, %41 : vector<16x32xf32>
    %cst_19 = arith.constant dense<0.000000e+00> : vector<16xf32>
    %43 = vector.multi_reduction <add>, %42, %cst_19 [1] : vector<16x32xf32> to vector<16xf32>
    %44 = vector.shape_cast %43 : vector<16xf32> to vector<16x1xf32>
    %cst_20 = arith.constant 3.200000e+01 : f32
    %45 = vector.broadcast %cst_20 : f32 to vector<16x1xf32>
    %46 = arith.divf %44, %45 : vector<16x1xf32>
    %47 = vector.broadcast %39 : vector<16x1xf32> to vector<16x32xf32>
    %48 = arith.subf %31, %47 : vector<16x32xf32>
    %cst_21 = arith.constant 9.99999974E-6 : f32
    %49 = vector.broadcast %cst_21 : f32 to vector<16x1xf32>
    %50 = arith.addf %46, %49 : vector<16x1xf32>
    %51 = math.rsqrt %50 : vector<16x1xf32>
    %52 = vector.broadcast %51 : vector<16x1xf32> to vector<16x32xf32>
    %53 = arith.mulf %48, %52 : vector<16x32xf32>
    %54 = vector.shape_cast %33 : vector<32xf32> to vector<1x32xf32>
    %55 = vector.broadcast %54 : vector<1x32xf32> to vector<16x32xf32>
    %56 = arith.mulf %53, %55 : vector<16x32xf32>
    %57 = vector.shape_cast %35 : vector<32xf32> to vector<1x32xf32>
    %58 = vector.broadcast %57 : vector<1x32xf32> to vector<16x32xf32>
    %59 = arith.addf %56, %58 : vector<16x32xf32>
    %60 = arith.truncf %29 : vector<8x32xf32> to vector<8x32xbf16>
    %c0_22 = arith.constant 0 : index
    %c0_23 = arith.constant 0 : index
    %61 = vector.load %arg7[%c0_22, %c0_23] : memref<32x128xf32, #tpu.memory_space<vmem>>, vector<32x128xf32>
    %62 = arith.truncf %61 : vector<32x128xf32> to vector<32x128xbf16>
    %cst_24 = arith.constant dense<0.000000e+00> : vector<8x128xf32>
    %63 = tpu.matmul %60, %62, %cst_24 {dimension_numbers = #tpu.dot_dimension_numbers<[1], [0], [0], [1], [0, 0, 1, 1], [], []>} : vector<8x32xbf16>, vector<32x128xbf16>, vector<8x128xf32> -> vector<8x128xf32>
    %64 = arith.truncf %59 : vector<16x32xf32> to vector<16x32xbf16>
    %c0_25 = arith.constant 0 : index
    %c0_26 = arith.constant 0 : index
    %65 = vector.load %arg8[%c0_25, %c0_26] : memref<32x256xf32, #tpu.memory_space<vmem>>, vector<32x256xf32>
    %66 = arith.truncf %65 : vector<32x256xf32> to vector<32x256xbf16>
    %cst_27 = arith.constant dense<0.000000e+00> : vector<16x256xf32>
    %67 = tpu.matmul %64, %66, %cst_27 {dimension_numbers = #tpu.dot_dimension_numbers<[1], [0], [0], [1], [0, 0, 1, 1], [], []>} : vector<16x32xbf16>, vector<32x256xbf16>, vector<16x256xf32> -> vector<16x256xf32>
    %68 = vector.extract_strided_slice %67 {offsets = [0, 0], sizes = [16, 128], strides = [1, 1]} : vector<16x256xf32> to vector<16x128xf32>
    %69 = vector.extract_strided_slice %67 {offsets = [0, 128], sizes = [16, 128], strides = [1, 1]} : vector<16x256xf32> to vector<16x128xf32>
    %70 = vector.extract_strided_slice %63 {offsets = [0, 0], sizes = [8, 32], strides = [1, 1]} : vector<8x128xf32> to vector<8x32xf32>
    %71 = arith.truncf %70 : vector<8x32xf32> to vector<8x32xbf16>
    %72 = vector.extract_strided_slice %68 {offsets = [0, 0], sizes = [16, 32], strides = [1, 1]} : vector<16x128xf32> to vector<16x32xf32>
    %73 = arith.truncf %72 : vector<16x32xf32> to vector<16x32xbf16>
    %74 = vector.extract_strided_slice %69 {offsets = [0, 0], sizes = [16, 32], strides = [1, 1]} : vector<16x128xf32> to vector<16x32xf32>
    %75 = arith.truncf %74 : vector<16x32xf32> to vector<16x32xbf16>
    %cst_28 = arith.constant dense<0.000000e+00> : vector<8x16xf32>
    %76 = tpu.matmul %71, %73, %cst_28 {dimension_numbers = #tpu.dot_dimension_numbers<[1], [1], [0], [0], [0, 0, 1, 0], [], []>} : vector<8x32xbf16>, vector<16x32xbf16>, vector<8x16xf32> -> vector<8x16xf32>
    %cst_29 = arith.constant 0.176776692 : f32
    %77 = vector.broadcast %cst_29 : f32 to vector<8x16xf32>
    %78 = arith.mulf %76, %77 : vector<8x16xf32>
    %cst_30 = arith.constant dense<0xFF800000> : vector<8xf32>
    %79 = vector.multi_reduction <maximumf>, %78, %cst_30 [1] : vector<8x16xf32> to vector<8xf32>
    %80 = vector.shape_cast %79 : vector<8xf32> to vector<8x1xf32>
    %81 = vector.broadcast %80 : vector<8x1xf32> to vector<8x16xf32>
    %82 = arith.subf %78, %81 : vector<8x16xf32>
    %83 = math.exp %82 : vector<8x16xf32>
    %cst_31 = arith.constant dense<0.000000e+00> : vector<8xf32>
    %84 = vector.multi_reduction <add>, %83, %cst_31 [1] : vector<8x16xf32> to vector<8xf32>
    %85 = vector.shape_cast %84 : vector<8xf32> to vector<8x1xf32>
    %86 = tpu.reciprocal %85 {approx = true} : vector<8x1xf32> -> vector<8x1xf32>
    %87 = vector.broadcast %86 : vector<8x1xf32> to vector<8x16xf32>
    %88 = arith.mulf %83, %87 : vector<8x16xf32>
    %89 = arith.truncf %88 : vector<8x16xf32> to vector<8x16xbf16>
    %cst_32 = arith.constant dense<0.000000e+00> : vector<8x32xf32>
    %90 = tpu.matmul %89, %75, %cst_32 {dimension_numbers = #tpu.dot_dimension_numbers<[1], [0], [0], [1], [0, 0, 1, 1], [], []>} : vector<8x16xbf16>, vector<16x32xbf16>, vector<8x32xf32> -> vector<8x32xf32>
    %91 = vector.extract_strided_slice %63 {offsets = [0, 32], sizes = [8, 32], strides = [1, 1]} : vector<8x128xf32> to vector<8x32xf32>
    %92 = arith.truncf %91 : vector<8x32xf32> to vector<8x32xbf16>
    %93 = vector.extract_strided_slice %68 {offsets = [0, 32], sizes = [16, 32], strides = [1, 1]} : vector<16x128xf32> to vector<16x32xf32>
    %94 = arith.truncf %93 : vector<16x32xf32> to vector<16x32xbf16>
    %95 = vector.extract_strided_slice %69 {offsets = [0, 32], sizes = [16, 32], strides = [1, 1]} : vector<16x128xf32> to vector<16x32xf32>
    %96 = arith.truncf %95 : vector<16x32xf32> to vector<16x32xbf16>
    %cst_33 = arith.constant dense<0.000000e+00> : vector<8x16xf32>
    %97 = tpu.matmul %92, %94, %cst_33 {dimension_numbers = #tpu.dot_dimension_numbers<[1], [1], [0], [0], [0, 0, 1, 0], [], []>} : vector<8x32xbf16>, vector<16x32xbf16>, vector<8x16xf32> -> vector<8x16xf32>
    %cst_34 = arith.constant 0.176776692 : f32
    %98 = vector.broadcast %cst_34 : f32 to vector<8x16xf32>
    %99 = arith.mulf %97, %98 : vector<8x16xf32>
    %cst_35 = arith.constant dense<0xFF800000> : vector<8xf32>
    %100 = vector.multi_reduction <maximumf>, %99, %cst_35 [1] : vector<8x16xf32> to vector<8xf32>
    %101 = vector.shape_cast %100 : vector<8xf32> to vector<8x1xf32>
    %102 = vector.broadcast %101 : vector<8x1xf32> to vector<8x16xf32>
    %103 = arith.subf %99, %102 : vector<8x16xf32>
    %104 = math.exp %103 : vector<8x16xf32>
    %cst_36 = arith.constant dense<0.000000e+00> : vector<8xf32>
    %105 = vector.multi_reduction <add>, %104, %cst_36 [1] : vector<8x16xf32> to vector<8xf32>
    %106 = vector.shape_cast %105 : vector<8xf32> to vector<8x1xf32>
    %107 = tpu.reciprocal %106 {approx = true} : vector<8x1xf32> -> vector<8x1xf32>
    %108 = vector.broadcast %107 : vector<8x1xf32> to vector<8x16xf32>
    %109 = arith.mulf %104, %108 : vector<8x16xf32>
    %110 = arith.truncf %109 : vector<8x16xf32> to vector<8x16xbf16>
    %cst_37 = arith.constant dense<0.000000e+00> : vector<8x32xf32>
    %111 = tpu.matmul %110, %96, %cst_37 {dimension_numbers = #tpu.dot_dimension_numbers<[1], [0], [0], [1], [0, 0, 1, 1], [], []>} : vector<8x16xbf16>, vector<16x32xbf16>, vector<8x32xf32> -> vector<8x32xf32>
    %112 = vector.extract_strided_slice %63 {offsets = [0, 64], sizes = [8, 32], strides = [1, 1]} : vector<8x128xf32> to vector<8x32xf32>
    %113 = arith.truncf %112 : vector<8x32xf32> to vector<8x32xbf16>
    %114 = vector.extract_strided_slice %68 {offsets = [0, 64], sizes = [16, 32], strides = [1, 1]} : vector<16x128xf32> to vector<16x32xf32>
    %115 = arith.truncf %114 : vector<16x32xf32> to vector<16x32xbf16>
    %116 = vector.extract_strided_slice %69 {offsets = [0, 64], sizes = [16, 32], strides = [1, 1]} : vector<16x128xf32> to vector<16x32xf32>
    %117 = arith.truncf %116 : vector<16x32xf32> to vector<16x32xbf16>
    %cst_38 = arith.constant dense<0.000000e+00> : vector<8x16xf32>
    %118 = tpu.matmul %113, %115, %cst_38 {dimension_numbers = #tpu.dot_dimension_numbers<[1], [1], [0], [0], [0, 0, 1, 0], [], []>} : vector<8x32xbf16>, vector<16x32xbf16>, vector<8x16xf32> -> vector<8x16xf32>
    %cst_39 = arith.constant 0.176776692 : f32
    %119 = vector.broadcast %cst_39 : f32 to vector<8x16xf32>
    %120 = arith.mulf %118, %119 : vector<8x16xf32>
    %cst_40 = arith.constant dense<0xFF800000> : vector<8xf32>
    %121 = vector.multi_reduction <maximumf>, %120, %cst_40 [1] : vector<8x16xf32> to vector<8xf32>
    %122 = vector.shape_cast %121 : vector<8xf32> to vector<8x1xf32>
    %123 = vector.broadcast %122 : vector<8x1xf32> to vector<8x16xf32>
    %124 = arith.subf %120, %123 : vector<8x16xf32>
    %125 = math.exp %124 : vector<8x16xf32>
    %cst_41 = arith.constant dense<0.000000e+00> : vector<8xf32>
    %126 = vector.multi_reduction <add>, %125, %cst_41 [1] : vector<8x16xf32> to vector<8xf32>
    %127 = vector.shape_cast %126 : vector<8xf32> to vector<8x1xf32>
    %128 = tpu.reciprocal %127 {approx = true} : vector<8x1xf32> -> vector<8x1xf32>
    %129 = vector.broadcast %128 : vector<8x1xf32> to vector<8x16xf32>
    %130 = arith.mulf %125, %129 : vector<8x16xf32>
    %131 = arith.truncf %130 : vector<8x16xf32> to vector<8x16xbf16>
    %cst_42 = arith.constant dense<0.000000e+00> : vector<8x32xf32>
    %132 = tpu.matmul %131, %117, %cst_42 {dimension_numbers = #tpu.dot_dimension_numbers<[1], [0], [0], [1], [0, 0, 1, 1], [], []>} : vector<8x16xbf16>, vector<16x32xbf16>, vector<8x32xf32> -> vector<8x32xf32>
    %133 = vector.extract_strided_slice %63 {offsets = [0, 96], sizes = [8, 32], strides = [1, 1]} : vector<8x128xf32> to vector<8x32xf32>
    %134 = arith.truncf %133 : vector<8x32xf32> to vector<8x32xbf16>
    %135 = vector.extract_strided_slice %68 {offsets = [0, 96], sizes = [16, 32], strides = [1, 1]} : vector<16x128xf32> to vector<16x32xf32>
    %136 = arith.truncf %135 : vector<16x32xf32> to vector<16x32xbf16>
    %137 = vector.extract_strided_slice %69 {offsets = [0, 96], sizes = [16, 32], strides = [1, 1]} : vector<16x128xf32> to vector<16x32xf32>
    %138 = arith.truncf %137 : vector<16x32xf32> to vector<16x32xbf16>
    %cst_43 = arith.constant dense<0.000000e+00> : vector<8x16xf32>
    %139 = tpu.matmul %134, %136, %cst_43 {dimension_numbers = #tpu.dot_dimension_numbers<[1], [1], [0], [0], [0, 0, 1, 0], [], []>} : vector<8x32xbf16>, vector<16x32xbf16>, vector<8x16xf32> -> vector<8x16xf32>
    %cst_44 = arith.constant 0.176776692 : f32
    %140 = vector.broadcast %cst_44 : f32 to vector<8x16xf32>
    %141 = arith.mulf %139, %140 : vector<8x16xf32>
    %cst_45 = arith.constant dense<0xFF800000> : vector<8xf32>
    %142 = vector.multi_reduction <maximumf>, %141, %cst_45 [1] : vector<8x16xf32> to vector<8xf32>
    %143 = vector.shape_cast %142 : vector<8xf32> to vector<8x1xf32>
    %144 = vector.broadcast %143 : vector<8x1xf32> to vector<8x16xf32>
    %145 = arith.subf %141, %144 : vector<8x16xf32>
    %146 = math.exp %145 : vector<8x16xf32>
    %cst_46 = arith.constant dense<0.000000e+00> : vector<8xf32>
    %147 = vector.multi_reduction <add>, %146, %cst_46 [1] : vector<8x16xf32> to vector<8xf32>
    %148 = vector.shape_cast %147 : vector<8xf32> to vector<8x1xf32>
    %149 = tpu.reciprocal %148 {approx = true} : vector<8x1xf32> -> vector<8x1xf32>
    %150 = vector.broadcast %149 : vector<8x1xf32> to vector<8x16xf32>
    %151 = arith.mulf %146, %150 : vector<8x16xf32>
    %152 = arith.truncf %151 : vector<8x16xf32> to vector<8x16xbf16>
    %cst_47 = arith.constant dense<0.000000e+00> : vector<8x32xf32>
    %153 = tpu.matmul %152, %138, %cst_47 {dimension_numbers = #tpu.dot_dimension_numbers<[1], [0], [0], [1], [0, 0, 1, 1], [], []>} : vector<8x16xbf16>, vector<16x32xbf16>, vector<8x32xf32> -> vector<8x32xf32>
    %154 = tpu.concatenate %90, %111, %132, %153 in 1 : vector<8x32xf32>, vector<8x32xf32>, vector<8x32xf32>, vector<8x32xf32> -> vector<8x128xf32>
    %155 = arith.truncf %154 : vector<8x128xf32> to vector<8x128xbf16>
    %c0_48 = arith.constant 0 : index
    %c0_49 = arith.constant 0 : index
    %156 = vector.load %arg9[%c0_48, %c0_49] : memref<128x32xf32, #tpu.memory_space<vmem>>, vector<128x32xf32>
    %157 = arith.truncf %156 : vector<128x32xf32> to vector<128x32xbf16>
    %cst_50 = arith.constant dense<0.000000e+00> : vector<8x32xf32>
    %158 = tpu.matmul %155, %157, %cst_50 {dimension_numbers = #tpu.dot_dimension_numbers<[1], [0], [0], [1], [0, 0, 1, 1], [], []>} : vector<8x128xbf16>, vector<128x32xbf16>, vector<8x32xf32> -> vector<8x32xf32>
    %c0_51 = arith.constant 0 : index
    %c0_52 = arith.constant 0 : index
    %159 = vector.load %arg10[%c0_51, %c0_52] : memref<1x32xf32, #tpu.memory_space<vmem>>, vector<1x32xf32>
    %160 = vector.shape_cast %159 : vector<1x32xf32> to vector<32xf32>
    %161 = vector.shape_cast %160 : vector<32xf32> to vector<1x32xf32>
    %162 = vector.broadcast %161 : vector<1x32xf32> to vector<8x32xf32>
    %163 = arith.addf %158, %162 : vector<8x32xf32>
    %c0_53 = arith.constant 0 : index
    %c0_54 = arith.constant 0 : index
    %c0_55 = arith.constant 0 : index
    %164 = vector.load %arg11[%c0_53, %c0_54, %c0_55] : memref<1x8x32xf32, #tpu.memory_space<vmem>>, vector<1x8x32xf32>
    %165 = vector.shape_cast %164 : vector<1x8x32xf32> to vector<8x32xf32>
    %166 = vector.shape_cast %163 : vector<8x32xf32> to vector<1x8x32xf32>
    tpu.vector_store %arg11[%c0_53, %c0_54, %c0_55], %166 {strides = array<i32>} : memref<1x8x32xf32, #tpu.memory_space<vmem>>, vector<1x8x32xf32>,
    return
  }
  func.func @transform_0(%arg0: i32) -> (i32, i32, i32) {
    %c0_i32 = arith.constant 0 : i32
    %c0_i32_0 = arith.constant 0 : i32
    %c0_i32_1 = arith.constant 0 : i32
    return %arg0, %c0_i32, %c0_i32_0 : i32, i32, i32
  }
  func.func @transform_1(%arg0: i32) -> (i32, i32, i32) {
    %c0_i32 = arith.constant 0 : i32
    %c0_i32_0 = arith.constant 0 : i32
    %c0_i32_1 = arith.constant 0 : i32
    return %arg0, %c0_i32, %c0_i32_0 : i32, i32, i32
  }
  func.func @transform_2(%arg0: i32) -> (i32, i32) {
    %c0_i32 = arith.constant 0 : i32
    %c0_i32_0 = arith.constant 0 : i32
    %c0_i32_1 = arith.constant 0 : i32
    return %c0_i32, %c0_i32_0 : i32, i32
  }
  func.func @transform_3(%arg0: i32) -> (i32, i32) {
    %c0_i32 = arith.constant 0 : i32
    %c0_i32_0 = arith.constant 0 : i32
    %c0_i32_1 = arith.constant 0 : i32
    return %c0_i32, %c0_i32_0 : i32, i32
  }
  func.func @transform_4(%arg0: i32) -> (i32, i32) {
    %c0_i32 = arith.constant 0 : i32
    %c0_i32_0 = arith.constant 0 : i32
    %c0_i32_1 = arith.constant 0 : i32
    return %c0_i32, %c0_i32_0 : i32, i32
  }
  func.func @transform_5(%arg0: i32) -> (i32, i32) {
    %c0_i32 = arith.constant 0 : i32
    %c0_i32_0 = arith.constant 0 : i32
    %c0_i32_1 = arith.constant 0 : i32
    return %c0_i32, %c0_i32_0 : i32, i32
  }
  func.func @transform_6(%arg0: i32) -> (i32, i32) {
    %c0_i32 = arith.constant 0 : i32
    %c0_i32_0 = arith.constant 0 : i32
    %c0_i32_1 = arith.constant 0 : i32
    return %c0_i32, %c0_i32_0 : i32, i32
  }
  func.func @transform_7(%arg0: i32) -> (i32, i32) {
    %c0_i32 = arith.constant 0 : i32
    %c0_i32_0 = arith.constant 0 : i32
    %c0_i32_1 = arith.constant 0 : i32
    return %c0_i32, %c0_i32_0 : i32, i32
  }
  func.func @transform_8(%arg0: i32) -> (i32, i32) {
    %c0_i32 = arith.constant 0 : i32
    %c0_i32_0 = arith.constant 0 : i32
    %c0_i32_1 = arith.constant 0 : i32
    return %c0_i32, %c0_i32_0 : i32, i32
  }
  func.func @transform_9(%arg0: i32) -> (i32, i32) {
    %c0_i32 = arith.constant 0 : i32
    %c0_i32_0 = arith.constant 0 : i32
    %c0_i32_1 = arith.constant 0 : i32
    return %c0_i32, %c0_i32_0 : i32, i32
  }
  func.func @transform_10(%arg0: i32) -> (i32, i32, i32) {
    %c0_i32 = arith.constant 0 : i32
    %c0_i32_0 = arith.constant 0 : i32
    %c0_i32_1 = arith.constant 0 : i32
    return %arg0, %c0_i32, %c0_i32_0 : i32, i32, i32
  }
}

</mosaic_0001>

<llo_original>
// kernel: mhca_forward.1
$region0: #{mhca_forward.1}
  #allocation0 [shape = 'u32[]', space=smem, size = 0x4, offset = 0x4, fixed_abs, tag = 'smem constant byte address 0x4 - core index']
  #allocation1 [shape = 'u32[144,128]{1,0:T(1,128)}', space=vmem, size = 0x12000, scoped, tag = 'internal scratch']
  %s0 = inlined_call_operand.vmem [shape: f32[2,8,32], index: 0, kind: input, shape index: {}]
  %s1 = inlined_call_operand.vmem [shape: f32[2,16,32], index: 1, kind: input, shape index: {}]
  %s2 = inlined_call_operand.vmem [shape: f32[1,32], index: 2, kind: input, shape index: {}]
  %s3 = inlined_call_operand.vmem [shape: f32[1,32], index: 3, kind: input, shape index: {}]
  %s4 = inlined_call_operand.vmem [shape: f32[1,32], index: 4, kind: input, shape index: {}]
  %s5 = inlined_call_operand.vmem [shape: f32[1,32], index: 5, kind: input, shape index: {}]
  %s6 = inlined_call_operand.vmem [shape: f32[32,128], index: 6, kind: input, shape index: {}]
  %s7 = inlined_call_operand.vmem [shape: f32[32,256], index: 7, kind: input, shape index: {}]
  %s8 = inlined_call_operand.vmem [shape: f32[128,32], index: 8, kind: input, shape index: {}]
  %s9 = inlined_call_operand.vmem [shape: f32[1,32], index: 9, kind: input, shape index: {}]
  %s10 = inlined_call_operand.hbm [shape: f32[2,8,32], index: 10, kind: output, shape index: {}]
  %s11 = sld [smem:[#allocation0]]
  $region73: #{mhca_forward.1} parent=0
    _
  %s13 = ssub.s32 1, %s11
  %s14 = scalar_select 0, %s13, %s11
  $region1: #{mhca_forward.1} parent=0
    #allocation2 [shape = 'u8[8192]{0}', space=vmem, size = 0x2000, scoped, tag = 'output window, operand 0']
    #allocation3 [shape = 's32[2]{0}', space=sflag, size = 0x8, scoped, tag = 'scoped memory for mhca_forward.1']
    %15 = vsyncpa [#allocation3], 0
    %s16 = scalar_lea.sflag [#allocation3], 1
    %17 = vsyncpa %s16, 0
    loop: start=0, step=1, limit=4
    $region2: #{mhca_forward.1} parent=1 // loop_pre_header
      _
    $region3: #{mhca_forward.1} parent=1 // loop_header
      %s19 = sphi 0, %s23
      %p20 = scmp.ge.s32.totalorder %s19, 4
      %s29 = sphi 0, %s31
      %s32 = sphi 0, %s29
      %s33 = sphi 0, %s32
      %s49 = sphi 0, %s33
      %s55 = sphi 0, %s57
      %s58 = sphi 0, %s55
      %s59 = sphi 0, %s58
      %s75 = sphi 0, %s59
      %s79 = sphi 0, %s79
      %s81 = sphi 0, %s79
      %s82 = sphi 0, %s81
      %s96 = sphi 0, %s82
      %s100 = sphi 0, %s100
      %s102 = sphi 0, %s100
      %s103 = sphi 0, %s102
      %s117 = sphi 0, %s103
      %s121 = sphi 0, %s121
      %s123 = sphi 0, %s121
      %s124 = sphi 0, %s123
      %s138 = sphi 0, %s124
      %s142 = sphi 0, %s142
      %s144 = sphi 0, %s142
      %s145 = sphi 0, %s144
      %s159 = sphi 0, %s145
      %s163 = sphi 0, %s163
      %s165 = sphi 0, %s163
      %s166 = sphi 0, %s165
      %s180 = sphi 0, %s166
      %s184 = sphi 0, %s184
      %s186 = sphi 0, %s184
      %s187 = sphi 0, %s186
      %s201 = sphi 0, %s187
      %s205 = sphi 0, %s205
      %s207 = sphi 0, %s205
      %s208 = sphi 0, %s207
      %s222 = sphi 0, %s208
      %s226 = sphi 0, %s226
      %s228 = sphi 0, %s226
      %s229 = sphi 0, %s228
      %s243 = sphi 0, %s229
      %s249 = sphi 0, %s251
      %s252 = sphi 0, %s249
      %s253 = sphi 0, %s252
      %s269 = sphi 0, %s253
    $region4: #{mhca_forward.1} parent=1 // loop_header_branch
      %22 = sbr.rel (%p20) target = $region8
    $region5: #{mhca_forward.1} parent=1 // loop_body
      %s24 = ssub.s32 %s19, 1
      %s25 = ssub.s32 %s19, 2
      %s26 = sadd.s32 %s19, 1
      %s27 = ssub.s32 %s19, %s26
      %p28 = scmp.eq.s32.totalorder %s27, 0
      %s30 = sadd.s32 %s29, 1
      %s31 = scalar_select %p28, %s29, %s30
      %p34 = pneg %p28
      %p35 = scmp.eq.s32.totalorder %s19, 1
      %p36 = por %p34, %p35
      %p37 = scmp.ne.s32.totalorder %s29, %s32
      %p38 = scmp.eq.s32.totalorder %s19, 0
      %p39 = por %p37, %p38
      %p40 = scmp.ne.s32.totalorder %s29, %s32
      %p41 = scmp.eq.s32.totalorder %s24, 1
      %p42 = por %p40, %p41
      %p43 = scmp.ne.s32.totalorder %s32, %s33
      %p44 = scmp.eq.s32.totalorder %s24, 0
      %p45 = por %p43, %p44
      %p46 = scmp.ne.s32.totalorder %s32, %s33
      %p47 = scmp.eq.s32.totalorder %s25, 1
      %p48 = por %p46, %p47
      %p50 = scmp.ne.s32.totalorder %s33, %s49
      %p51 = scmp.eq.s32.totalorder %s25, 0
      %p52 = por %p50, %p51
      %s53 = ssub.s32 %s19, %s26
      %p54 = scmp.eq.s32.totalorder %s53, 0
      %s56 = sadd.s32 %s55, 1
      %s57 = scalar_select %p54, %s55, %s56
      %p60 = pneg %p54
      %p61 = scmp.eq.s32.totalorder %s19, 1
      %p62 = por %p60, %p61
      %p63 = scmp.ne.s32.totalorder %s55, %s58
      %p64 = scmp.eq.s32.totalorder %s19, 0
      %p65 = por %p63, %p64
      %p66 = scmp.ne.s32.totalorder %s55, %s58
      %p67 = scmp.eq.s32.totalorder %s24, 1
      %p68 = por %p66, %p67
      %p69 = scmp.ne.s32.totalorder %s58, %s59
      %p70 = scmp.eq.s32.totalorder %s24, 0
      %p71 = por %p69, %p70
      %p72 = scmp.ne.s32.totalorder %s58, %s59
      %p73 = scmp.eq.s32.totalorder %s25, 1
      %p74 = por %p72, %p73
      %p76 = scmp.ne.s32.totalorder %s59, %s75
      %p77 = scmp.eq.s32.totalorder %s25, 0
      %p78 = por %p76, %p77
      %s80 = sadd.s32 %s79, 1
      %p83 = scmp.eq.s32.totalorder %s19, 1
      %p84 = scmp.ne.s32.totalorder %s79, %s81
      %p85 = scmp.eq.s32.totalorder %s19, 0
      %p86 = por %p84, %p85
      %p87 = scmp.ne.s32.totalorder %s79, %s81
      %p88 = scmp.eq.s32.totalorder %s24, 1
      %p89 = por %p87, %p88
      %p90 = scmp.ne.s32.totalorder %s81, %s82
      %p91 = scmp.eq.s32.totalorder %s24, 0
      %p92 = por %p90, %p91
      %p93 = scmp.ne.s32.totalorder %s81, %s82
      %p94 = scmp.eq.s32.totalorder %s25, 1
      %p95 = por %p93, %p94
      %p97 = scmp.ne.s32.totalorder %s82, %s96
      %p98 = scmp.eq.s32.totalorder %s25, 0
      %p99 = por %p97, %p98
      %s101 = sadd.s32 %s100, 1
      %p104 = scmp.eq.s32.totalorder %s19, 1
      %p105 = scmp.ne.s32.totalorder %s100, %s102
      %p106 = scmp.eq.s32.totalorder %s19, 0
      %p107 = por %p105, %p106
      %p108 = scmp.ne.s32.totalorder %s100, %s102
      %p109 = scmp.eq.s32.totalorder %s24, 1
      %p110 = por %p108, %p109
      %p111 = scmp.ne.s32.totalorder %s102, %s103
      %p112 = scmp.eq.s32.totalorder %s24, 0
      %p113 = por %p111, %p112
      %p114 = scmp.ne.s32.totalorder %s102, %s103
      %p115 = scmp.eq.s32.totalorder %s25, 1
      %p116 = por %p114, %p115
      %p118 = scmp.ne.s32.totalorder %s103, %s117
      %p119 = scmp.eq.s32.totalorder %s25, 0
      %p120 = por %p118, %p119
      %s122 = sadd.s32 %s121, 1
      %p125 = scmp.eq.s32.totalorder %s19, 1
      %p126 = scmp.ne.s32.totalorder %s121, %s123
      %p127 = scmp.eq.s32.totalorder %s19, 0
      %p128 = por %p126, %p127
      %p129 = scmp.ne.s32.totalorder %s121, %s123
      %p130 = scmp.eq.s32.totalorder %s24, 1
      %p131 = por %p129, %p130
      %p132 = scmp.ne.s32.totalorder %s123, %s124
      %p133 = scmp.eq.s32.totalorder %s24, 0
      %p134 = por %p132, %p133
      %p135 = scmp.ne.s32.totalorder %s123, %s124
      %p136 = scmp.eq.s32.totalorder %s25, 1
      %p137 = por %p135, %p136
      %p139 = scmp.ne.s32.totalorder %s124, %s138
      %p140 = scmp.eq.s32.totalorder %s25, 0
      %p141 = por %p139, %p140
      %s143 = sadd.s32 %s142, 1
      %p146 = scmp.eq.s32.totalorder %s19, 1
      %p147 = scmp.ne.s32.totalorder %s142, %s144
      %p148 = scmp.eq.s32.totalorder %s19, 0
      %p149 = por %p147, %p148
      %p150 = scmp.ne.s32.totalorder %s142, %s144
      %p151 = scmp.eq.s32.totalorder %s24, 1
      %p152 = por %p150, %p151
      %p153 = scmp.ne.s32.totalorder %s144, %s145
      %p154 = scmp.eq.s32.totalorder %s24, 0
      %p155 = por %p153, %p154
      %p156 = scmp.ne.s32.totalorder %s144, %s145
      %p157 = scmp.eq.s32.totalorder %s25, 1
      %p158 = por %p156, %p157
      %p160 = scmp.ne.s32.totalorder %s145, %s159
      %p161 = scmp.eq.s32.totalorder %s25, 0
      %p162 = por %p160, %p161
      %s164 = sadd.s32 %s163, 1
      %p167 = scmp.eq.s32.totalorder %s19, 1
      %p168 = scmp.ne.s32.totalorder %s163, %s165
      %p169 = scmp.eq.s32.totalorder %s19, 0
      %p170 = por %p168, %p169
      %p171 = scmp.ne.s32.totalorder %s163, %s165
      %p172 = scmp.eq.s32.totalorder %s24, 1
      %p173 = por %p171, %p172
      %p174 = scmp.ne.s32.totalorder %s165, %s166
      %p175 = scmp.eq.s32.totalorder %s24, 0
      %p176 = por %p174, %p175
      %p177 = scmp.ne.s32.totalorder %s165, %s166
      %p178 = scmp.eq.s32.totalorder %s25, 1
      %p179 = por %p177, %p178
      %p181 = scmp.ne.s32.totalorder %s166, %s180
      %p182 = scmp.eq.s32.totalorder %s25, 0
      %p183 = por %p181, %p182
      %s185 = sadd.s32 %s184, 1
      %p188 = scmp.eq.s32.totalorder %s19, 1
      %p189 = scmp.ne.s32.totalorder %s184, %s186
      %p190 = scmp.eq.s32.totalorder %s19, 0
      %p191 = por %p189, %p190
      %p192 = scmp.ne.s32.totalorder %s184, %s186
      %p193 = scmp.eq.s32.totalorder %s24, 1
      %p194 = por %p192, %p193
      %p195 = scmp.ne.s32.totalorder %s186, %s187
      %p196 = scmp.eq.s32.totalorder %s24, 0
      %p197 = por %p195, %p196
      %p198 = scmp.ne.s32.totalorder %s186, %s187
      %p199 = scmp.eq.s32.totalorder %s25, 1
      %p200 = por %p198, %p199
      %p202 = scmp.ne.s32.totalorder %s187, %s201
      %p203 = scmp.eq.s32.totalorder %s25, 0
      %p204 = por %p202, %p203
      %s206 = sadd.s32 %s205, 1
      %p209 = scmp.eq.s32.totalorder %s19, 1
      %p210 = scmp.ne.s32.totalorder %s205, %s207
      %p211 = scmp.eq.s32.totalorder %s19, 0
      %p212 = por %p210, %p211
      %p213 = scmp.ne.s32.totalorder %s205, %s207
      %p214 = scmp.eq.s32.totalorder %s24, 1
      %p215 = por %p213, %p214
      %p216 = scmp.ne.s32.totalorder %s207, %s208
      %p217 = scmp.eq.s32.totalorder %s24, 0
      %p218 = por %p216, %p217
      %p219 = scmp.ne.s32.totalorder %s207, %s208
      %p220 = scmp.eq.s32.totalorder %s25, 1
      %p221 = por %p219, %p220
      %p223 = scmp.ne.s32.totalorder %s208, %s222
      %p224 = scmp.eq.s32.totalorder %s25, 0
      %p225 = por %p223, %p224
      %s227 = sadd.s32 %s226, 1
      %p230 = scmp.eq.s32.totalorder %s19, 1
      %p231 = scmp.ne.s32.totalorder %s226, %s228
      %p232 = scmp.eq.s32.totalorder %s19, 0
      %p233 = por %p231, %p232
      %p234 = scmp.ne.s32.totalorder %s226, %s228
      %p235 = scmp.eq.s32.totalorder %s24, 1
      %p236 = por %p234, %p235
      %p237 = scmp.ne.s32.totalorder %s228, %s229
      %p238 = scmp.eq.s32.totalorder %s24, 0
      %p239 = por %p237, %p238
      %p240 = scmp.ne.s32.totalorder %s228, %s229
      %p241 = scmp.eq.s32.totalorder %s25, 1
      %p242 = por %p240, %p241
      %p244 = scmp.ne.s32.totalorder %s229, %s243
      %p245 = scmp.eq.s32.totalorder %s25, 0
      %p246 = por %p244, %p245
      %s247 = ssub.s32 %s19, %s26
      %p248 = scmp.eq.s32.totalorder %s247, 0
      %s250 = sadd.s32 %s249, 1
      %s251 = scalar_select %p248, %s249, %s250
      %p254 = pneg %p248
      %p255 = scmp.eq.s32.totalorder %s19, 1
      %p256 = por %p254, %p255
      %p257 = scmp.ne.s32.totalorder %s249, %s252
      %p258 = scmp.eq.s32.totalorder %s19, 0
      %p259 = por %p257, %p258
      %p260 = scmp.ne.s32.totalorder %s249, %s252
      %p261 = scmp.eq.s32.totalorder %s24, 1
      %p262 = por %p260, %p261
      %p263 = scmp.ne.s32.totalorder %s252, %s253
      %p264 = scmp.eq.s32.totalorder %s24, 0
      %p265 = por %p263, %p264
      %p266 = scmp.ne.s32.totalorder %s252, %s253
      %p267 = scmp.eq.s32.totalorder %s25, 1
      %p268 = por %p266, %p267
      %p270 = scmp.ne.s32.totalorder %s253, %s269
      %p271 = scmp.eq.s32.totalorder %s25, 0
      %p272 = por %p270, %p271
      %p273 = scmp.le.s32.totalorder 1, %s19
      %p274 = scmp.lt.s32.totalorder %s19, 3
      %p275 = pnand %p273, %p274
      %p276 = pneg %p275
      // Predicated region
      $region9: #{mhca_forward.1} parent=5 // pred_check
        _
      $region10: #{mhca_forward.1} parent=5 // pred_check_branch
        %278 = sbr.rel (%p275) target = $region12
      $region11: #{mhca_forward.1} parent=5 // pred_region
        %s279 = ssub.s32 %s19, 1
        // Predicated region
        $region13: #{mhca_forward.1} parent=11 // pred_check
          %p280 = pneg %p92
        $region14: #{mhca_forward.1} parent=11 // pred_check_branch
          %282 = sbr.rel (%p280) target = $region16
        $region15: #{mhca_forward.1} parent=11 // pred_region
          _
        $region16: #{mhca_forward.1} parent=11 // pred_fallthru
          _
        // Predicated region
        $region17: #{mhca_forward.1} parent=11 // pred_check
          %p283 = pneg %p113
        $region18: #{mhca_forward.1} parent=11 // pred_check_branch
          %285 = sbr.rel (%p283) target = $region20
        $region19: #{mhca_forward.1} parent=11 // pred_region
          _
        $region20: #{mhca_forward.1} parent=11 // pred_fallthru
          _
        // Predicated region
        $region21: #{mhca_forward.1} parent=11 // pred_check
          %p286 = pneg %p134
        $region22: #{mhca_forward.1} parent=11 // pred_check_branch
          %288 = sbr.rel (%p286) target = $region24
        $region23: #{mhca_forward.1} parent=11 // pred_region
          _
        $region24: #{mhca_forward.1} parent=11 // pred_fallthru
          _
        // Predicated region
        $region25: #{mhca_forward.1} parent=11 // pred_check
          %p289 = pneg %p155
        $region26: #{mhca_forward.1} parent=11 // pred_check_branch
          %291 = sbr.rel (%p289) target = $region28
        $region27: #{mhca_forward.1} parent=11 // pred_region
          _
        $region28: #{mhca_forward.1} parent=11 // pred_fallthru
          _
        // Predicated region
        $region29: #{mhca_forward.1} parent=11 // pred_check
          %p292 = pneg %p176
        $region30: #{mhca_forward.1} parent=11 // pred_check_branch
          %294 = sbr.rel (%p292) target = $region32
        $region31: #{mhca_forward.1} parent=11 // pred_region
          _
        $region32: #{mhca_forward.1} parent=11 // pred_fallthru
          _
        // Predicated region
        $region33: #{mhca_forward.1} parent=11 // pred_check
          %p295 = pneg %p197
        $region34: #{mhca_forward.1} parent=11 // pred_check_branch
          %297 = sbr.rel (%p295) target = $region36
        $region35: #{mhca_forward.1} parent=11 // pred_region
          _
        $region36: #{mhca_forward.1} parent=11 // pred_fallthru
          _
        // Predicated region
        $region37: #{mhca_forward.1} parent=11 // pred_check
          %p298 = pneg %p218
        $region38: #{mhca_forward.1} parent=11 // pred_check_branch
          %300 = sbr.rel (%p298) target = $region40
        $region39: #{mhca_forward.1} parent=11 // pred_region
          _
        $region40: #{mhca_forward.1} parent=11 // pred_fallthru
          _
        // Predicated region
        $region41: #{mhca_forward.1} parent=11 // pred_check
          %p301 = pneg %p239
        $region42: #{mhca_forward.1} parent=11 // pred_check_branch
          %303 = sbr.rel (%p301) target = $region44
        $region43: #{mhca_forward.1} parent=11 // pred_region
          _
        $region44: #{mhca_forward.1} parent=11 // pred_fallthru
          _
      $region12: #{mhca_forward.1} parent=5 // pred_fallthru
        _
      %p304 = scmp.lt.s32.totalorder %s19, 2
      // Predicated region
      $region45: #{mhca_forward.1} parent=5 // pred_check
        %p305 = pneg %p304
      $region46: #{mhca_forward.1} parent=5 // pred_check_branch
        %307 = sbr.rel (%p305) target = $region48
      $region47: #{mhca_forward.1} parent=5 // pred_region
        // Predicated region
        $region49: #{mhca_forward.1} parent=47 // pred_check
          %p308 = pneg %p39
        $region50: #{mhca_forward.1} parent=47 // pred_check_branch
          %310 = sbr.rel (%p308) target = $region52
        $region51: #{mhca_forward.1} parent=47 // pred_region
          %p311 = scmp.lt.s32.totalorder %s19, 1
          %s312 = scalar_select %p311, %s19, 1
          %s313 = smul.addr %s312, 8
          %s314 = scalar_lea.vmem %s0, %s313
        $region52: #{mhca_forward.1} parent=47 // pred_fallthru
          _
        // Predicated region
        $region53: #{mhca_forward.1} parent=47 // pred_check
          %p315 = pneg %p65
        $region54: #{mhca_forward.1} parent=47 // pred_check_branch
          %317 = sbr.rel (%p315) target = $region56
        $region55: #{mhca_forward.1} parent=47 // pred_region
          %p318 = scmp.lt.s32.totalorder %s19, 1
          %s319 = scalar_select %p318, %s19, 1
          %s320 = smul.addr %s319, 2
          %s321 = smul.addr %s320, 8
          %s322 = scalar_lea.vmem %s1, %s321
        $region56: #{mhca_forward.1} parent=47 // pred_fallthru
          _
      $region48: #{mhca_forward.1} parent=5 // pred_fallthru
        _
      %p323 = scmp.le.s32.totalorder 1, %s19
      %p324 = scmp.lt.s32.totalorder %s19, 3
      %p325 = pnand %p323, %p324
      %p326 = pneg %p325
      // Predicated region
      $region57: #{mhca_forward.1} parent=5 // pred_check
        _
      $region58: #{mhca_forward.1} parent=5 // pred_check_branch
        %328 = sbr.rel (%p325) target = $region60
      $region59: #{mhca_forward.1} parent=5 // pred_region
        %s329 = ssub.s32 %s19, 1
        %p330 = scmp.lt.s32.totalorder %s24, 1
        %s331 = scalar_select %p330, %s24, 1
        %s332 = smul.addr %s331, 8
        %s333 = scalar_lea.vmem %s0, %s332
        %p334 = pneg %p45
        %p335 = pneg %p42
        %p336 = scmp.lt.s32.totalorder %s24, 1
        %s337 = scalar_select %p336, %s24, 1
        %s338 = smul.addr %s337, 2
        %s339 = smul.addr %s338, 8
        %s340 = scalar_lea.vmem %s1, %s339
        %p341 = pneg %p71
        %p342 = pneg %p68
        %p343 = pneg %p92
        %p344 = pneg %p89
        %p345 = pneg %p113
        %p346 = pneg %p110
        %p347 = pneg %p134
        %p348 = pneg %p131
        %p349 = pneg %p155
        %p350 = pneg %p152
        %p351 = pneg %p176
        %p352 = pneg %p173
        %p353 = pneg %p197
        %p354 = pneg %p194
        %p355 = pneg %p218
        %p356 = pneg %p215
        %p357 = pneg %p239
        %p358 = pneg %p236
        %p359 = pneg %p265
        %p360 = pneg %p262
        %s361 = sand.u32 %s252, 1
        %s362 = scalar_lea.sflag [#allocation3], %s361
        %s363 = sand.u32 %s252, 1
        %s364 = smul.addr %s363, 8
        %s365 = scalar_lea.vmem [#allocation2], %s364
        %p366 = scmp.lt.s32.totalorder %s24, 1
        %s367 = scalar_select %p366, %s24, 1
        %s368 = smul.addr %s367, 8
        %s369 = scalar_lea.vmem %s0, %s368
        %p370 = scmp.lt.s32.totalorder %s24, 1
        %s371 = scalar_select %p370, %s24, 1
        %s372 = smul.addr %s371, 2
        %s373 = smul.addr %s372, 8
        %s374 = scalar_lea.vmem %s1, %s373
        %v376 = vld [vmem:[%s369] sm:$0xff]
        %v377 = vld [vmem:[%s2] sm:$0x1]
        %v378 = vld [vmem:[%s3] sm:$0x1]
        %vm379 = vcmask 261120
        %v380 = vsel %vm379, %v376, 0.0
        %381 = vadd.xlane.f32.xlu0 %v380
        %v382 = vpop.xlane.xlu0 %381
        %v383 = vrcp.pop 32.0
        %v384 = vmul.f32 %v382, %v383
        %v385 = vsub.f32 %v376, %v384
        %v386 = vmul.f32 %v385, %v385
        %v387 = vsel %vm379, %v386, 0.0
        %388 = vadd.xlane.f32.xlu0 %v387
        %v389 = vpop.xlane.xlu0 %388
        %v390 = vmul.f32 %v389, %v383
        %v391 = vadd.f32 %v390, 1e-05
        %v392 = vrsqrt.pop %v391
        %v393 = vmul.f32 %v385, %v392
        %v395 = vlaneseq
        %v396 = vshrl.u32 %v395, 7
        %v397 = vsub.s32 0, %v396
        %v398 = vrot.slane %v377, %v397
        %v400 = vmul.f32 %v393, %v398
        %v402 = vlaneseq
        %v403 = vshrl.u32 %v402, 7
        %v404 = vsub.s32 0, %v403
        %v405 = vrot.slane %v378, %v404
        %v407 = vadd.f32 %v400, %v405
        %v408 = vld [vmem:[%s374] sm:$0xff]
        %v409 = vld [vmem:[%s374 + $0x8] sm:$0xff]
        %v410 = vld [vmem:[%s4] sm:$0x1]
        %v411 = vld [vmem:[%s5] sm:$0x1]
        %v412 = vsel %vm379, %v408, 0.0
        %413 = vadd.xlane.f32.xlu0 %v412
        %v414 = vpop.xlane.xlu0 %413
        %v415 = vsel %vm379, %v409, 0.0
        %416 = vadd.xlane.f32.xlu0 %v415
        %v417 = vpop.xlane.xlu0 %416
        %v418 = vmul.f32 %v414, %v383
        %v419 = vmul.f32 %v417, %v383
        %v420 = vsub.f32 %v408, %v418
        %v421 = vsub.f32 %v409, %v419
        %v422 = vmul.f32 %v420, %v420
        %v423 = vmul.f32 %v421, %v421
        %v424 = vsel %vm379, %v422, 0.0
        %425 = vadd.xlane.f32.xlu0 %v424
        %v426 = vpop.xlane.xlu0 %425
        %v427 = vsel %vm379, %v423, 0.0
        %428 = vadd.xlane.f32.xlu0 %v427
        %v429 = vpop.xlane.xlu0 %428
        %v430 = vmul.f32 %v426, %v383
        %v431 = vmul.f32 %v429, %v383
        %v432 = vadd.f32 %v430, 1e-05
        %v433 = vadd.f32 %v431, 1e-05
        %v434 = vrsqrt.pop %v432
        %v435 = vrsqrt.pop %v433
        %v436 = vmul.f32 %v420, %v434
        %v437 = vmul.f32 %v421, %v435
        %v439 = vlaneseq
        %v440 = vshrl.u32 %v439, 7
        %v441 = vsub.s32 0, %v440
        %v442 = vrot.slane %v410, %v441
        %v444 = vmul.f32 %v436, %v442
        %v445 = vmul.f32 %v437, %v442
        %v447 = vlaneseq
        %v448 = vshrl.u32 %v447, 7
        %v449 = vsub.s32 0, %v448
        %v450 = vrot.slane %v411, %v449
        %v452 = vadd.f32 %v444, %v450
        %v453 = vadd.f32 %v445, %v450
        %v454 = vpack.c.bf16 %v407, %v407
        %v455 = vld [vmem:[%s6] sm:$0xff]
        %v456 = vld [vmem:[%s6 + $0x8] sm:$0xff]
        %v457 = vld [vmem:[%s6 + $0x10] sm:$0xff]
        %v458 = vld [vmem:[%s6 + $0x18] sm:$0xff]
        %v459 = vpack.c.bf16 %v456, %v455
        %v460 = vpack.c.bf16 %v458, %v457
        %v462 = vsel %vm379, %v454, 0
        %464 = vmatprep.subr.bf16.mxu0 0
        %465 = vmatpush1.bf16.msra.mxu0 0
        %466 = vmatprep.subr.bf16.mxu0 0
        %467 = vmatpush1.bf16.msra.mxu0 0
        %468 = vmatprep.subr.bf16.mxu0 0
        %469 = vmatpush1.bf16.msra.mxu0 0
        %470 = vmatprep.subr.bf16.mxu0 0
        %471 = vmatpush1.bf16.msra.mxu0 0
        %472 = vmatprep.subr.bf16.mxu0 0
        %473 = vmatpush1.bf16.msra.mxu0 0
        %474 = vmatprep.subr.bf16.mxu0 0
        %475 = vmatpush1.bf16.msra.mxu0 0
        %476 = vmatprep.subr.bf16.mxu0 0
        %477 = vmatpush1.bf16.msra.mxu0 %v460
        %478 = vmatprep.subr.bf16.mxu0 0
        %479 = vmatpush1.bf16.msra.mxu0 %v459
        %480 = vmatprep.subr.bf16.mxu0 0
        %481 = vmatpush2.bf16.msra.mxu0 0
        %482 = vmatprep.subr.bf16.mxu0 0
        %483 = vmatpush2.bf16.msra.mxu0 0
        %484 = vmatprep.subr.bf16.mxu0 0
        %485 = vmatpush2.bf16.msra.mxu0 0
        %486 = vmatprep.subr.bf16.mxu0 0
        %487 = vmatpush2.bf16.msra.mxu0 0
        %488 = vmatprep.subr.bf16.mxu0 0
        %489 = vmatpush2.bf16.msra.mxu0 0
        %490 = vmatprep.subr.bf16.mxu0 0
        %491 = vmatpush2.bf16.msra.mxu0 0
        %492 = vmatprep.subr.bf16.mxu0 0
        %493 = vmatpush2.bf16.msra.mxu0 0
        %494 = vmatprep.subr.bf16.mxu0 0
        %495 = vmatpush2.bf16.msra.mxu0 0
        %496 = vmatprep.mubr.bf16.mxu0 0
        %497 = vmatmul.mubr.bf16.gmra.mxu0 %v462
        %v498 = vpop.f32.mrf.mxu0
        %v499 = vadd.f32 0.0, %v498
        %v500 = vpop.f32.mrf.mxu0
        %v501 = vpop.f32.mrf.mxu0
        %v502 = vpop.f32.mrf.mxu0
        %503 = vdwg.mxu0
        %v504 = vpack.c.bf16 %v453, %v452
        %v505 = vld [vmem:[%s7] sm:$0xff]
        %v506 = vld [vmem:[%s7 + $0x8] sm:$0xff]
        %v507 = vld [vmem:[%s7 + $0x10] sm:$0xff]
        %v508 = vld [vmem:[%s7 + $0x18] sm:$0xff]
        %v509 = vld [vmem:[%s7 + $0x20] sm:$0xff]
        %v510 = vld [vmem:[%s7 + $0x28] sm:$0xff]
        %v511 = vld [vmem:[%s7 + $0x30] sm:$0xff]
        %v512 = vld [vmem:[%s7 + $0x38] sm:$0xff]
        %v513 = vpack.c.bf16 %v507, %v505
        %v514 = vpack.c.bf16 %v508, %v506
        %v515 = vpack.c.bf16 %v511, %v509
        %v516 = vpack.c.bf16 %v512, %v510
        %v518 = vsel %vm379, %v504, 0
        %520 = vmatprep.subr.bf16.mxu0 0
        %521 = vmatpush1.bf16.msra.mxu0 0
        %522 = vmatprep.subr.bf16.mxu0 0
        %523 = vmatpush1.bf16.msra.mxu0 0
        %524 = vmatprep.subr.bf16.mxu0 0
        %525 = vmatpush1.bf16.msra.mxu0 0
        %526 = vmatprep.subr.bf16.mxu0 0
        %527 = vmatpush1.bf16.msra.mxu0 0
        %528 = vmatprep.subr.bf16.mxu0 0
        %529 = vmatpush1.bf16.msra.mxu0 0
        %530 = vmatprep.subr.bf16.mxu0 0
        %531 = vmatpush1.bf16.msra.mxu0 0
        %532 = vmatprep.subr.bf16.mxu0 %v516
        %533 = vmatpush1.bf16.msra.mxu0 %v515
        %534 = vmatprep.subr.bf16.mxu0 %v514
        %535 = vmatpush1.bf16.msra.mxu0 %v513
        %536 = vmatprep.subr.bf16.mxu0 0
        %537 = vmatpush2.bf16.msra.mxu0 0
        %538 = vmatprep.subr.bf16.mxu0 0
        %539 = vmatpush2.bf16.msra.mxu0 0
        %540 = vmatprep.subr.bf16.mxu0 0
        %541 = vmatpush2.bf16.msra.mxu0 0
        %542 = vmatprep.subr.bf16.mxu0 0
        %543 = vmatpush2.bf16.msra.mxu0 0
        %544 = vmatprep.subr.bf16.mxu0 0
        %545 = vmatpush2.bf16.msra.mxu0 0
        %546 = vmatprep.subr.bf16.mxu0 0
        %547 = vmatpush2.bf16.msra.mxu0 0
        %548 = vmatprep.subr.bf16.mxu0 0
        %549 = vmatpush2.bf16.msra.mxu0 0
        %550 = vmatprep.subr.bf16.mxu0 0
        %551 = vmatpush2.bf16.msra.mxu0 0
        %552 = vmatprep.mubr.bf16.mxu0 0
        %553 = vmatmul.mubr.bf16.gmra.mxu0 %v518
        %v554 = vpop.f32.mrf.mxu0
        %v555 = vadd.f32 0.0, %v554
        %v556 = vpop.f32.mrf.mxu0
        %v557 = vadd.f32 0.0, %v556
        %v558 = vpop.f32.mrf.mxu0
        %v559 = vadd.f32 0.0, %v558
        %v560 = vpop.f32.mrf.mxu0
        %v561 = vadd.f32 0.0, %v560
        %562 = vdwg.mxu0
        %v563 = vpack.c.bf16 %v499, %v499
        %v564 = vpack.c.bf16 %v559, %v555
        %v565 = vpack.c.bf16 %v561, %v557
        %v567 = vsel %vm379, %v563, 0
        %v570 = vsel %vm379, %v564, 0
        %572 = vmatprep.subr.bf16.mxu0 0
        %573 = vmatpush1.bf16.xpose.msra.mxu0 0
        %574 = vmatprep.subr.bf16.mxu0 0
        %575 = vmatpush1.bf16.xpose.msra.mxu0 0
        %576 = vmatprep.subr.bf16.mxu0 0
        %577 = vmatpush1.bf16.xpose.msra.mxu0 0
        %578 = vmatprep.subr.bf16.mxu0 0
        %579 = vmatpush1.bf16.xpose.msra.mxu0 0
        %580 = vmatprep.subr.bf16.mxu0 0
        %581 = vmatpush1.bf16.xpose.msra.mxu0 0
        %582 = vmatprep.subr.bf16.mxu0 0
        %583 = vmatpush1.bf16.xpose.msra.mxu0 0
        %584 = vmatprep.subr.bf16.mxu0 0
        %585 = vmatpush1.bf16.xpose.msra.mxu0 0
        %586 = vmatprep.subr.bf16.mxu0 0
        %587 = vmatpush1.bf16.xpose.msra.mxu0 %v570
        %588 = vmatprep.subr.bf16.mxu0 0
        %589 = vmatpush2.bf16.xpose.msra.mxu0 0
        %590 = vmatprep.subr.bf16.mxu0 0
        %591 = vmatpush2.bf16.xpose.msra.mxu0 0
        %592 = vmatprep.subr.bf16.mxu0 0
        %593 = vmatpush2.bf16.xpose.msra.mxu0 0
        %594 = vmatprep.subr.bf16.mxu0 0
        %595 = vmatpush2.bf16.xpose.msra.mxu0 0
        %596 = vmatprep.subr.bf16.mxu0 0
        %597 = vmatpush2.bf16.xpose.msra.mxu0 0
        %598 = vmatprep.subr.bf16.mxu0 0
        %599 = vmatpush2.bf16.xpose.msra.mxu0 0
        %600 = vmatprep.subr.bf16.mxu0 0
        %601 = vmatpush2.bf16.xpose.msra.mxu0 0
        %602 = vmatprep.subr.bf16.mxu0 0
        %603 = vmatpush2.bf16.xpose.msra.mxu0 0
        %604 = vmatprep.mubr.bf16.mxu0 0
        %605 = vmatmul.mubr.bf16.gmra.mxu0 %v567
        %v606 = vpop.f32.mrf.mxu0
        %v607 = vadd.f32 0.0, %v606
        %v608 = vpop.f32.mrf.mxu0
        %v609 = vpop.f32.mrf.mxu0
        %v610 = vpop.f32.mrf.mxu0
        %611 = vdwg.mxu0
        %v612 = vmul.f32 %v607, 0.17677669
        %vm613 = vcmask 130048
        %v614 = vsel %vm613, %v612, -inf
        %615 = vmax.xlane.f32.xlu0 %v614
        %v616 = vpop.xlane.xlu0 %615
        %v617 = vsub.f32 %v612, %v616
        %v618 = vmul.f32 %v617, 1.442695
        %v619 = vpow.pop %v618
        %v620 = vsel %vm613, %v619, 0.0
        %621 = vadd.xlane.f32.xlu0 %v620
        %v622 = vpop.xlane.xlu0 %621
        %v623 = vrcp.pop %v622
        %v624 = vmul.f32 %v619, %v623
        %v625 = vpack.c.bf16 %v624, %v624
        %v627 = vsel %vm613, %v625, 0
        %629 = vmatprep.subr.bf16.mxu0 0
        %630 = vmatpush1.bf16.msra.mxu0 0
        %631 = vmatprep.subr.bf16.mxu0 0
        %632 = vmatpush1.bf16.msra.mxu0 0
        %633 = vmatprep.subr.bf16.mxu0 0
        %634 = vmatpush1.bf16.msra.mxu0 0
        %635 = vmatprep.subr.bf16.mxu0 0
        %636 = vmatpush1.bf16.msra.mxu0 0
        %637 = vmatprep.subr.bf16.mxu0 0
        %638 = vmatpush1.bf16.msra.mxu0 0
        %639 = vmatprep.subr.bf16.mxu0 0
        %640 = vmatpush1.bf16.msra.mxu0 0
        %641 = vmatprep.subr.bf16.mxu0 0
        %642 = vmatpush1.bf16.msra.mxu0 0
        %643 = vmatprep.subr.bf16.mxu0 0
        %644 = vmatpush1.bf16.msra.mxu0 %v565
        %645 = vmatprep.subr.bf16.mxu0 0
        %646 = vmatpush2.bf16.msra.mxu0 0
        %647 = vmatprep.subr.bf16.mxu0 0
        %648 = vmatpush2.bf16.msra.mxu0 0
        %649 = vmatprep.subr.bf16.mxu0 0
        %650 = vmatpush2.bf16.msra.mxu0 0
        %651 = vmatprep.subr.bf16.mxu0 0
        %652 = vmatpush2.bf16.msra.mxu0 0
        %653 = vmatprep.subr.bf16.mxu0 0
        %654 = vmatpush2.bf16.msra.mxu0 0
        %655 = vmatprep.subr.bf16.mxu0 0
        %656 = vmatpush2.bf16.msra.mxu0 0
        %657 = vmatprep.subr.bf16.mxu0 0
        %658 = vmatpush2.bf16.msra.mxu0 0
        %659 = vmatprep.subr.bf16.mxu0 0
        %660 = vmatpush2.bf16.msra.mxu0 0
        %661 = vmatprep.mubr.bf16.mxu0 0
        %662 = vmatmul.mubr.bf16.gmra.mxu0 %v627
        %v663 = vpop.f32.mrf.mxu0
        %v664 = vadd.f32 0.0, %v663
        %v665 = vpop.f32.mrf.mxu0
        %v666 = vpop.f32.mrf.mxu0
        %v667 = vpop.f32.mrf.mxu0
        %668 = vdwg.mxu0
        %670 = vrot.lane.b32.xlu0 %v563, 96
        %v671 = vpop.permute.xlu0 %670
        %673 = vrot.lane.b32.xlu0 %v564, 96
        %v674 = vpop.permute.xlu0 %673
        %v676 = vsel %vm379, %v671, 0
        %v679 = vsel %vm379, %v674, 0
        %681 = vmatprep.subr.bf16.mxu0 0
        %682 = vmatpush1.bf16.xpose.msra.mxu0 0
        %683 = vmatprep.subr.bf16.mxu0 0
        %684 = vmatpush1.bf16.xpose.msra.mxu0 0
        %685 = vmatprep.subr.bf16.mxu0 0
        %686 = vmatpush1.bf16.xpose.msra.mxu0 0
        %687 = vmatprep.subr.bf16.mxu0 0
        %688 = vmatpush1.bf16.xpose.msra.mxu0 0
        %689 = vmatprep.subr.bf16.mxu0 0
        %690 = vmatpush1.bf16.xpose.msra.mxu0 0
        %691 = vmatprep.subr.bf16.mxu0 0
        %692 = vmatpush1.bf16.xpose.msra.mxu0 0
        %693 = vmatprep.subr.bf16.mxu0 0
        %694 = vmatpush1.bf16.xpose.msra.mxu0 0
        %695 = vmatprep.subr.bf16.mxu0 0
        %696 = vmatpush1.bf16.xpose.msra.mxu0 %v679
        %697 = vmatprep.subr.bf16.mxu0 0
        %698 = vmatpush2.bf16.xpose.msra.mxu0 0
        %699 = vmatprep.subr.bf16.mxu0 0
        %700 = vmatpush2.bf16.xpose.msra.mxu0 0
        %701 = vmatprep.subr.bf16.mxu0 0
        %702 = vmatpush2.bf16.xpose.msra.mxu0 0
        %703 = vmatprep.subr.bf16.mxu0 0
        %704 = vmatpush2.bf16.xpose.msra.mxu0 0
        %705 = vmatprep.subr.bf16.mxu0 0
        %706 = vmatpush2.bf16.xpose.msra.mxu0 0
        %707 = vmatprep.subr.bf16.mxu0 0
        %708 = vmatpush2.bf16.xpose.msra.mxu0 0
        %709 = vmatprep.subr.bf16.mxu0 0
        %710 = vmatpush2.bf16.xpose.msra.mxu0 0
        %711 = vmatprep.subr.bf16.mxu0 0
        %712 = vmatpush2.bf16.xpose.msra.mxu0 0
        %713 = vmatprep.mubr.bf16.mxu0 0
        %714 = vmatmul.mubr.bf16.gmra.mxu0 %v676
        %v715 = vpop.f32.mrf.mxu0
        %v716 = vadd.f32 0.0, %v715
        %v717 = vpop.f32.mrf.mxu0
        %v718 = vpop.f32.mrf.mxu0
        %v719 = vpop.f32.mrf.mxu0
        %720 = vdwg.mxu0
        %v721 = vmul.f32 %v716, 0.17677669
        %v722 = vsel %vm613, %v721, -inf
        %723 = vmax.xlane.f32.xlu0 %v722
        %v724 = vpop.xlane.xlu0 %723
        %v725 = vsub.f32 %v721, %v724
        %v726 = vmul.f32 %v725, 1.442695
        %v727 = vpow.pop %v726
        %v728 = vsel %vm613, %v727, 0.0
        %729 = vadd.xlane.f32.xlu0 %v728
        %v730 = vpop.xlane.xlu0 %729
        %v731 = vrcp.pop %v730
        %v732 = vmul.f32 %v727, %v731
        %v733 = vpack.c.bf16 %v732, %v732
        %735 = vrot.lane.b32.xlu0 %v565, 96
        %v736 = vpop.permute.xlu0 %735
        %v739 = vsel %vm613, %v733, 0
        %741 = vmatprep.subr.bf16.mxu0 0
        %742 = vmatpush1.bf16.msra.mxu0 0
        %743 = vmatprep.subr.bf16.mxu0 0
        %744 = vmatpush1.bf16.msra.mxu0 0
        %745 = vmatprep.subr.bf16.mxu0 0
        %746 = vmatpush1.bf16.msra.mxu0 0
        %747 = vmatprep.subr.bf16.mxu0 0
        %748 = vmatpush1.bf16.msra.mxu0 0
        %749 = vmatprep.subr.bf16.mxu0 0
        %750 = vmatpush1.bf16.msra.mxu0 0
        %751 = vmatprep.subr.bf16.mxu0 0
        %752 = vmatpush1.bf16.msra.mxu0 0
        %753 = vmatprep.subr.bf16.mxu0 0
        %754 = vmatpush1.bf16.msra.mxu0 0
        %755 = vmatprep.subr.bf16.mxu0 0
        %756 = vmatpush1.bf16.msra.mxu0 %v736
        %757 = vmatprep.subr.bf16.mxu0 0
        %758 = vmatpush2.bf16.msra.mxu0 0
        %759 = vmatprep.subr.bf16.mxu0 0
        %760 = vmatpush2.bf16.msra.mxu0 0
        %761 = vmatprep.subr.bf16.mxu0 0
        %762 = vmatpush2.bf16.msra.mxu0 0
        %763 = vmatprep.subr.bf16.mxu0 0
        %764 = vmatpush2.bf16.msra.mxu0 0
        %765 = vmatprep.subr.bf16.mxu0 0
        %766 = vmatpush2.bf16.msra.mxu0 0
        %767 = vmatprep.subr.bf16.mxu0 0
        %768 = vmatpush2.bf16.msra.mxu0 0
        %769 = vmatprep.subr.bf16.mxu0 0
        %770 = vmatpush2.bf16.msra.mxu0 0
        %771 = vmatprep.subr.bf16.mxu0 0
        %772 = vmatpush2.bf16.msra.mxu0 0
        %773 = vmatprep.mubr.bf16.mxu0 0
        %774 = vmatmul.mubr.bf16.gmra.mxu0 %v739
        %v775 = vpop.f32.mrf.mxu0
        %v776 = vadd.f32 0.0, %v775
        %v777 = vpop.f32.mrf.mxu0
        %v778 = vpop.f32.mrf.mxu0
        %v779 = vpop.f32.mrf.mxu0
        %780 = vdwg.mxu0
        %781 = vrot.lane.b32.xlu0 %v563, 64
        %v782 = vpop.permute.xlu0 %781
        %783 = vrot.lane.b32.xlu0 %v564, 64
        %v784 = vpop.permute.xlu0 %783
        %v786 = vsel %vm379, %v782, 0
        %v789 = vsel %vm379, %v784, 0
        %791 = vmatprep.subr.bf16.mxu0 0
        %792 = vmatpush1.bf16.xpose.msra.mxu0 0
        %793 = vmatprep.subr.bf16.mxu0 0
        %794 = vmatpush1.bf16.xpose.msra.mxu0 0
        %795 = vmatprep.subr.bf16.mxu0 0
        %796 = vmatpush1.bf16.xpose.msra.mxu0 0
        %797 = vmatprep.subr.bf16.mxu0 0
        %798 = vmatpush1.bf16.xpose.msra.mxu0 0
        %799 = vmatprep.subr.bf16.mxu0 0
        %800 = vmatpush1.bf16.xpose.msra.mxu0 0
        %801 = vmatprep.subr.bf16.mxu0 0
        %802 = vmatpush1.bf16.xpose.msra.mxu0 0
        %803 = vmatprep.subr.bf16.mxu0 0
        %804 = vmatpush1.bf16.xpose.msra.mxu0 0
        %805 = vmatprep.subr.bf16.mxu0 0
        %806 = vmatpush1.bf16.xpose.msra.mxu0 %v789
        %807 = vmatprep.subr.bf16.mxu0 0
        %808 = vmatpush2.bf16.xpose.msra.mxu0 0
        %809 = vmatprep.subr.bf16.mxu0 0
        %810 = vmatpush2.bf16.xpose.msra.mxu0 0
        %811 = vmatprep.subr.bf16.mxu0 0
        %812 = vmatpush2.bf16.xpose.msra.mxu0 0
        %813 = vmatprep.subr.bf16.mxu0 0
        %814 = vmatpush2.bf16.xpose.msra.mxu0 0
        %815 = vmatprep.subr.bf16.mxu0 0
        %816 = vmatpush2.bf16.xpose.msra.mxu0 0
        %817 = vmatprep.subr.bf16.mxu0 0
        %818 = vmatpush2.bf16.xpose.msra.mxu0 0
        %819 = vmatprep.subr.bf16.mxu0 0
        %820 = vmatpush2.bf16.xpose.msra.mxu0 0
        %821 = vmatprep.subr.bf16.mxu0 0
        %822 = vmatpush2.bf16.xpose.msra.mxu0 0
        %823 = vmatprep.mubr.bf16.mxu0 0
        %824 = vmatmul.mubr.bf16.gmra.mxu0 %v786
        %v825 = vpop.f32.mrf.mxu0
        %v826 = vadd.f32 0.0, %v825
        %v827 = vpop.f32.mrf.mxu0
        %v828 = vpop.f32.mrf.mxu0
        %v829 = vpop.f32.mrf.mxu0
        %830 = vdwg.mxu0
        %v831 = vmul.f32 %v826, 0.17677669
        %v832 = vsel %vm613, %v831, -inf
        %833 = vmax.xlane.f32.xlu0 %v832
        %v834 = vpop.xlane.xlu0 %833
        %v835 = vsub.f32 %v831, %v834
        %v836 = vmul.f32 %v835, 1.442695
        %v837 = vpow.pop %v836
        %v838 = vsel %vm613, %v837, 0.0
        %839 = vadd.xlane.f32.xlu0 %v838
        %v840 = vpop.xlane.xlu0 %839
        %v841 = vrcp.pop %v840
        %v842 = vmul.f32 %v837, %v841
        %v843 = vpack.c.bf16 %v842, %v842
        %844 = vrot.lane.b32.xlu0 %v565, 64
        %v845 = vpop.permute.xlu0 %844
        %v848 = vsel %vm613, %v843, 0
        %850 = vmatprep.subr.bf16.mxu0 0
        %851 = vmatpush1.bf16.msra.mxu0 0
        %852 = vmatprep.subr.bf16.mxu0 0
        %853 = vmatpush1.bf16.msra.mxu0 0
        %854 = vmatprep.subr.bf16.mxu0 0
        %855 = vmatpush1.bf16.msra.mxu0 0
        %856 = vmatprep.subr.bf16.mxu0 0
        %857 = vmatpush1.bf16.msra.mxu0 0
        %858 = vmatprep.subr.bf16.mxu0 0
        %859 = vmatpush1.bf16.msra.mxu0 0
        %860 = vmatprep.subr.bf16.mxu0 0
        %861 = vmatpush1.bf16.msra.mxu0 0
        %862 = vmatprep.subr.bf16.mxu0 0
        %863 = vmatpush1.bf16.msra.mxu0 0
        %864 = vmatprep.subr.bf16.mxu0 0
        %865 = vmatpush1.bf16.msra.mxu0 %v845
        %866 = vmatprep.subr.bf16.mxu0 0
        %867 = vmatpush2.bf16.msra.mxu0 0
        %868 = vmatprep.subr.bf16.mxu0 0
        %869 = vmatpush2.bf16.msra.mxu0 0
        %870 = vmatprep.subr.bf16.mxu0 0
        %871 = vmatpush2.bf16.msra.mxu0 0
        %872 = vmatprep.subr.bf16.mxu0 0
        %873 = vmatpush2.bf16.msra.mxu0 0
        %874 = vmatprep.subr.bf16.mxu0 0
        %875 = vmatpush2.bf16.msra.mxu0 0
        %876 = vmatprep.subr.bf16.mxu0 0
        %877 = vmatpush2.bf16.msra.mxu0 0
        %878 = vmatprep.subr.bf16.mxu0 0
        %879 = vmatpush2.bf16.msra.mxu0 0
        %880 = vmatprep.subr.bf16.mxu0 0
        %881 = vmatpush2.bf16.msra.mxu0 0
        %882 = vmatprep.mubr.bf16.mxu0 0
        %883 = vmatmul.mubr.bf16.gmra.mxu0 %v848
        %v884 = vpop.f32.mrf.mxu0
        %v885 = vadd.f32 0.0, %v884
        %v886 = vpop.f32.mrf.mxu0
        %v887 = vpop.f32.mrf.mxu0
        %v888 = vpop.f32.mrf.mxu0
        %889 = vdwg.mxu0
        %890 = vrot.lane.b32.xlu0 %v563, 32
        %v891 = vpop.permute.xlu0 %890
        %892 = vrot.lane.b32.xlu0 %v564, 32
        %v893 = vpop.permute.xlu0 %892
        %v895 = vsel %vm379, %v891, 0
        %v898 = vsel %vm379, %v893, 0
        %900 = vmatprep.subr.bf16.mxu0 0
        %901 = vmatpush1.bf16.xpose.msra.mxu0 0
        %902 = vmatprep.subr.bf16.mxu0 0
        %903 = vmatpush1.bf16.xpose.msra.mxu0 0
        %904 = vmatprep.subr.bf16.mxu0 0
        %905 = vmatpush1.bf16.xpose.msra.mxu0 0
        %906 = vmatprep.subr.bf16.mxu0 0
        %907 = vmatpush1.bf16.xpose.msra.mxu0 0
        %908 = vmatprep.subr.bf16.mxu0 0
        %909 = vmatpush1.bf16.xpose.msra.mxu0 0
        %910 = vmatprep.subr.bf16.mxu0 0
        %911 = vmatpush1.bf16.xpose.msra.mxu0 0
        %912 = vmatprep.subr.bf16.mxu0 0
        %913 = vmatpush1.bf16.xpose.msra.mxu0 0
        %914 = vmatprep.subr.bf16.mxu0 0
        %915 = vmatpush1.bf16.xpose.msra.mxu0 %v898
        %916 = vmatprep.subr.bf16.mxu0 0
        %917 = vmatpush2.bf16.xpose.msra.mxu0 0
        %918 = vmatprep.subr.bf16.mxu0 0
        %919 = vmatpush2.bf16.xpose.msra.mxu0 0
        %920 = vmatprep.subr.bf16.mxu0 0
        %921 = vmatpush2.bf16.xpose.msra.mxu0 0
        %922 = vmatprep.subr.bf16.mxu0 0
        %923 = vmatpush2.bf16.xpose.msra.mxu0 0
        %924 = vmatprep.subr.bf16.mxu0 0
        %925 = vmatpush2.bf16.xpose.msra.mxu0 0
        %926 = vmatprep.subr.bf16.mxu0 0
        %927 = vmatpush2.bf16.xpose.msra.mxu0 0
        %928 = vmatprep.subr.bf16.mxu0 0
        %929 = vmatpush2.bf16.xpose.msra.mxu0 0
        %930 = vmatprep.subr.bf16.mxu0 0
        %931 = vmatpush2.bf16.xpose.msra.mxu0 0
        %932 = vmatprep.mubr.bf16.mxu0 0
        %933 = vmatmul.mubr.bf16.gmra.mxu0 %v895
        %v934 = vpop.f32.mrf.mxu0
        %v935 = vadd.f32 0.0, %v934
        %v936 = vpop.f32.mrf.mxu0
        %v937 = vpop.f32.mrf.mxu0
        %v938 = vpop.f32.mrf.mxu0
        %939 = vdwg.mxu0
        %v940 = vmul.f32 %v935, 0.17677669
        %v941 = vsel %vm613, %v940, -inf
        %942 = vmax.xlane.f32.xlu0 %v941
        %v943 = vpop.xlane.xlu0 %942
        %v944 = vsub.f32 %v940, %v943
        %v945 = vmul.f32 %v944, 1.442695
        %v946 = vpow.pop %v945
        %v947 = vsel %vm613, %v946, 0.0
        %948 = vadd.xlane.f32.xlu0 %v947
        %v949 = vpop.xlane.xlu0 %948
        %v950 = vrcp.pop %v949
        %v951 = vmul.f32 %v946, %v950
        %v952 = vpack.c.bf16 %v951, %v951
        %953 = vrot.lane.b32.xlu0 %v565, 32
        %v954 = vpop.permute.xlu0 %953
        %v957 = vsel %vm613, %v952, 0
        %959 = vmatprep.subr.bf16.mxu0 0
        %960 = vmatpush1.bf16.msra.mxu0 0
        %961 = vmatprep.subr.bf16.mxu0 0
        %962 = vmatpush1.bf16.msra.mxu0 0
        %963 = vmatprep.subr.bf16.mxu0 0
        %964 = vmatpush1.bf16.msra.mxu0 0
        %965 = vmatprep.subr.bf16.mxu0 0
        %966 = vmatpush1.bf16.msra.mxu0 0
        %967 = vmatprep.subr.bf16.mxu0 0
        %968 = vmatpush1.bf16.msra.mxu0 0
        %969 = vmatprep.subr.bf16.mxu0 0
        %970 = vmatpush1.bf16.msra.mxu0 0
        %971 = vmatprep.subr.bf16.mxu0 0
        %972 = vmatpush1.bf16.msra.mxu0 0
        %973 = vmatprep.subr.bf16.mxu0 0
        %974 = vmatpush1.bf16.msra.mxu0 %v954
        %975 = vmatprep.subr.bf16.mxu0 0
        %976 = vmatpush2.bf16.msra.mxu0 0
        %977 = vmatprep.subr.bf16.mxu0 0
        %978 = vmatpush2.bf16.msra.mxu0 0
        %979 = vmatprep.subr.bf16.mxu0 0
        %980 = vmatpush2.bf16.msra.mxu0 0
        %981 = vmatprep.subr.bf16.mxu0 0
        %982 = vmatpush2.bf16.msra.mxu0 0
        %983 = vmatprep.subr.bf16.mxu0 0
        %984 = vmatpush2.bf16.msra.mxu0 0
        %985 = vmatprep.subr.bf16.mxu0 0
        %986 = vmatpush2.bf16.msra.mxu0 0
        %987 = vmatprep.subr.bf16.mxu0 0
        %988 = vmatpush2.bf16.msra.mxu0 0
        %989 = vmatprep.subr.bf16.mxu0 0
        %990 = vmatpush2.bf16.msra.mxu0 0
        %991 = vmatprep.mubr.bf16.mxu0 0
        %992 = vmatmul.mubr.bf16.gmra.mxu0 %v957
        %v993 = vpop.f32.mrf.mxu0
        %v994 = vadd.f32 0.0, %v993
        %v995 = vpop.f32.mrf.mxu0
        %v996 = vpop.f32.mrf.mxu0
        %v997 = vpop.f32.mrf.mxu0
        %998 = vdwg.mxu0
        %1000 = vrot.lane.b32.xlu0 %v776, 32
        %v1001 = vpop.permute.xlu0 %1000
        %1004 = vrot.lane.b32.xlu0 %v885, 64
        %v1005 = vpop.permute.xlu0 %1004
        %1008 = vrot.lane.b32.xlu0 %v994, 96
        %v1009 = vpop.permute.xlu0 %1008
        %v1011 = vsel %vm379, %v664, %v1001
        %vm1012 = vcmask 523264
        %v1013 = vsel %vm1012, %v1011, %v1005
        %vm1014 = vcmask 785408
        %v1015 = vsel %vm1014, %v1013, %v1009
        %v1016 = vpack.c.bf16 %v1015, %v1015
        %v1017 = vld [vmem:[%s8] sm:$0xff]
        %v1018 = vld [vmem:[%s8 + $0x8] sm:$0xff]
        %v1019 = vld [vmem:[%s8 + $0x10] sm:$0xff]
        %v1020 = vld [vmem:[%s8 + $0x18] sm:$0xff]
        %v1021 = vld [vmem:[%s8 + $0x20] sm:$0xff]
        %v1022 = vld [vmem:[%s8 + $0x28] sm:$0xff]
        %v1023 = vld [vmem:[%s8 + $0x30] sm:$0xff]
        %v1024 = vld [vmem:[%s8 + $0x38] sm:$0xff]
        %v1025 = vld [vmem:[%s8 + $0x40] sm:$0xff]
        %v1026 = vld [vmem:[%s8 + $0x48] sm:$0xff]
        %v1027 = vld [vmem:[%s8 + $0x50] sm:$0xff]
        %v1028 = vld [vmem:[%s8 + $0x58] sm:$0xff]
        %v1029 = vld [vmem:[%s8 + $0x60] sm:$0xff]
        %v1030 = vld [vmem:[%s8 + $0x68] sm:$0xff]
        %v1031 = vld [vmem:[%s8 + $0x70] sm:$0xff]
        %v1032 = vld [vmem:[%s8 + $0x78] sm:$0xff]
        %v1033 = vpack.c.bf16 %v1018, %v1017
        %v1034 = vpack.c.bf16 %v1020, %v1019
        %v1035 = vpack.c.bf16 %v1022, %v1021
        %v1036 = vpack.c.bf16 %v1024, %v1023
        %v1037 = vpack.c.bf16 %v1026, %v1025
        %v1038 = vpack.c.bf16 %v1028, %v1027
        %v1039 = vpack.c.bf16 %v1030, %v1029
        %v1040 = vpack.c.bf16 %v1032, %v1031
        %v1041 = vld [vmem:[%s9] sm:$0x1]
        %v1043 = vlaneseq
        %v1044 = vshrl.u32 %v1043, 7
        %v1045 = vsub.s32 0, %v1044
        %v1046 = vrot.slane %v1041, %v1045
        %1048 = vmatprep.subr.bf16.mxu0 0
        %1049 = vmatpush1.bf16.msra.mxu0 %v1040
        %1050 = vmatprep.subr.bf16.mxu0 0
        %1051 = vmatpush1.bf16.msra.mxu0 %v1039
        %1052 = vmatprep.subr.bf16.mxu0 0
        %1053 = vmatpush1.bf16.msra.mxu0 %v1038
        %1054 = vmatprep.subr.bf16.mxu0 0
        %1055 = vmatpush1.bf16.msra.mxu0 %v1037
        %1056 = vmatprep.subr.bf16.mxu0 0
        %1057 = vmatpush1.bf16.msra.mxu0 %v1036
        %1058 = vmatprep.subr.bf16.mxu0 0
        %1059 = vmatpush1.bf16.msra.mxu0 %v1035
        %1060 = vmatprep.subr.bf16.mxu0 0
        %1061 = vmatpush1.bf16.msra.mxu0 %v1034
        %1062 = vmatprep.subr.bf16.mxu0 0
        %1063 = vmatpush1.bf16.msra.mxu0 %v1033
        %1064 = vmatprep.subr.bf16.mxu0 0
        %1065 = vmatpush2.bf16.msra.mxu0 0
        %1066 = vmatprep.subr.bf16.mxu0 0
        %1067 = vmatpush2.bf16.msra.mxu0 0
        %1068 = vmatprep.subr.bf16.mxu0 0
        %1069 = vmatpush2.bf16.msra.mxu0 0
        %1070 = vmatprep.subr.bf16.mxu0 0
        %1071 = vmatpush2.bf16.msra.mxu0 0
        %1072 = vmatprep.subr.bf16.mxu0 0
        %1073 = vmatpush2.bf16.msra.mxu0 0
        %1074 = vmatprep.subr.bf16.mxu0 0
        %1075 = vmatpush2.bf16.msra.mxu0 0
        %1076 = vmatprep.subr.bf16.mxu0 0
        %1077 = vmatpush2.bf16.msra.mxu0 0
        %1078 = vmatprep.subr.bf16.mxu0 0
        %1079 = vmatpush2.bf16.msra.mxu0 0
        %1080 = vmatprep.mubr.bf16.mxu0 0
        %1081 = vmatmul.mubr.bf16.gmra.mxu0 %v1016
        %v1082 = vpop.f32.mrf.mxu0
        %v1083 = vadd.f32 %v1046, %v1082
        %v1084 = vpop.f32.mrf.mxu0
        %v1085 = vpop.f32.mrf.mxu0
        %v1086 = vpop.f32.mrf.mxu0
        %1087 = vdwg.mxu0
        %1088 = vst.msk [vmem:[%s365] sm:$0xff] %vm379, %v1083
        %s1089 = sand.u32 %s252, 1
        %s1090 = scalar_lea.sflag [#allocation3], %s1089
        %s1091 = sand.u32 %s252, 1
        %s1092 = smul.addr %s1091, 8
        %s1093 = scalar_lea.vmem [#allocation2], %s1092
        // Predicated region
        $region61: #{mhca_forward.1} parent=59 // pred_check
          %p1094 = pneg %p262
        $region62: #{mhca_forward.1} parent=59 // pred_check_branch
          %1096 = sbr.rel (%p1094) target = $region64
        $region63: #{mhca_forward.1} parent=59 // pred_region
          %s1098 = ssub.s32 128, 128
          %1099 = vsyncadd %s1090, %s1098
          %s1100 = smul.addr %s24, 128
          %s1101 = scalar_lea.hbm %s10, %s1100
          %s1103 = sshll.u32 %s1093, 4
          %s1104 = int_to_ptr.vmem [resolvable:$true] %s1103
          %1106 = dma.vmem_to_hbm [thread:$0]  %s1104, 128, %s1101, %s1090
        $region64: #{mhca_forward.1} parent=59 // pred_fallthru
          _
      $region60: #{mhca_forward.1} parent=5 // pred_fallthru
        _
      %p1107 = scmp.le.s32.totalorder 2, %s19
      // Predicated region
      $region65: #{mhca_forward.1} parent=5 // pred_check
        %p1108 = pneg %p1107
      $region66: #{mhca_forward.1} parent=5 // pred_check_branch
        %1110 = sbr.rel (%p1108) target = $region68
      $region67: #{mhca_forward.1} parent=5 // pred_region
        %s1111 = ssub.s32 %s19, 2
        // Predicated region
        $region69: #{mhca_forward.1} parent=67 // pred_check
          %p1112 = pneg %p268
        $region70: #{mhca_forward.1} parent=67 // pred_check_branch
          %1114 = sbr.rel (%p1112) target = $region72
        $region71: #{mhca_forward.1} parent=67 // pred_region
          %s1115 = sand.u32 %s253, 1
          %s1116 = scalar_lea.sflag [#allocation3], %s1115
          %s1117 = sand.u32 %s253, 1
          %s1118 = smul.addr %s1117, 8
          %s1119 = scalar_lea.vmem [#allocation2], %s1118
          %1120 = dma.done %s1116, 128
        $region72: #{mhca_forward.1} parent=67 // pred_fallthru
          _
      $region68: #{mhca_forward.1} parent=5 // pred_fallthru
        _
    $region6: #{mhca_forward.1} parent=1 // loop_footer
      %s23 = sadd.s32 1, %s19
    $region7: #{mhca_forward.1} parent=1 // loop_footer_branch
      %18 = sbr.rel target = $region3
    $region8: #{mhca_forward.1} parent=1 // loop_exit
      _
    %1121 = vsyncpa [#allocation3], 1
    %s1122 = scalar_lea.sflag [#allocation3], 1
    %1123 = vsyncpa %s1122, 1

</llo_original>
